<compile_context>
chip_gen: v7x
topology: tpu7x:2x2x1
jax: 0.10.0
libtpu: 0.0.40
codegen_flags: <defaults>
</compile_context>

<pallas_src>
import functools

import jax
import jax.numpy as jnp
from jax.experimental import pallas as pl
from jax.experimental.pallas import tpu as pltpu

NEG_BIG = -1.0e30
CPAD = 128  # lane padding for the 3-class namespace head


def _round_up(x, m):
    return ((x + m - 1) // m) * m


def _go_embedder_kernel(nt_half, tn,
                        term_sc,                         # scalar prefetch (SMEM, (B,))
                        term_ref, nbr_ref, lab_ref,      # (B,1) int32, resident
                        emb_hbm,                         # (V,E) f32, memory_space=ANY
                        w_ref,                           # (E, 2*tn) bf16, streamed
                        b_ref,                           # (nt, 2*tn) f32, resident
                        w3_ref, b3_ref,                  # (E,CPAD) bf16 / (1,CPAD) f32
                        lse1_ref, tz1_ref, lse2_ref, tz2_ref, ns_ref,   # (1,B,1) each
                        gbuf, hid_ref, gsem,
                        m1, l1, t1, m2, l2, t2):
    c = pl.program_id(0)          # vocab half (split across TensorCores on v7x)
    k = pl.program_id(1)          # tile within the half (sequential reduction)
    nk = pl.num_programs(1)
    B = hid_ref.shape[0]
    g = c * nt_half + k           # global vocab-tile index

    @pl.when(k == 0)
    def _gather_and_init():
        # Gather the B embedding rows straight from HBM (scalar-prefetched ids),
        # then ReLU + bf16-cast once into a resident scratch.
        for b in range(B):
            pltpu.make_async_copy(emb_hbm.at[pl.ds(term_sc[b], 1)],
                                  gbuf.at[pl.ds(b, 1)],
                                  gsem.at[b]).start()
        for b in range(B):
            pltpu.make_async_copy(emb_hbm.at[pl.ds(term_sc[b], 1)],
                                  gbuf.at[pl.ds(b, 1)],
                                  gsem.at[b]).wait()
        hid_ref[...] = jnp.maximum(gbuf[...], 0.0).astype(jnp.bfloat16)

        # Init online-softmax accumulators for this vocab half.
        m1[...] = jnp.full_like(m1, NEG_BIG)
        m2[...] = jnp.full_like(m2, NEG_BIG)
        l1[...] = jnp.zeros_like(l1)
        l2[...] = jnp.zeros_like(l2)
        t1[...] = jnp.zeros_like(t1)
        t2[...] = jnp.zeros_like(t2)

    hidden = hid_ref[...]                                      # (B, E) bf16

    # One fused (E, 2*tn) weight tile -> one MXU call for both big heads.
    z = jnp.dot(hidden, w_ref[...], preferred_element_type=jnp.float32)
    z = z + b_ref[pl.ds(g, 1), :]                              # (B, 2*tn) f32
    z1 = z[:, :tn]
    z2 = z[:, tn:]

    # Global column index of this vocab tile (for the target-logit pick).
    col = jax.lax.broadcasted_iota(jnp.int32, (B, tn), 1) + g * tn

    # Online softmax update, head 1 (term).
    m1_new = jnp.maximum(m1[...], jnp.max(z1, axis=1, keepdims=True))
    l1[...] = (l1[...] * jnp.exp(m1[...] - m1_new)
               + jnp.sum(jnp.exp(z1 - m1_new), axis=1, keepdims=True))
    m1[...] = m1_new
    t1[...] += jnp.sum(jnp.where(col == term_ref[...], z1, 0.0),
                       axis=1, keepdims=True)

    # Online softmax update, head 2 (neighbor).
    m2_new = jnp.maximum(m2[...], jnp.max(z2, axis=1, keepdims=True))
    l2[...] = (l2[...] * jnp.exp(m2[...] - m2_new)
               + jnp.sum(jnp.exp(z2 - m2_new), axis=1, keepdims=True))
    m2[...] = m2_new
    t2[...] += jnp.sum(jnp.where(col == nbr_ref[...], z2, 0.0),
                       axis=1, keepdims=True)

    @pl.when(k == nk - 1)
    def _finalize():
        # Per-half partials; the two halves are combined with logaddexp in the
        # (tiny) jitted wrapper epilogue.
        lse1_ref[0] = m1[...] + jnp.log(l1[...])
        tz1_ref[0] = t1[...]
        lse2_ref[0] = m2[...] + jnp.log(l2[...])
        tz2_ref[0] = t2[...]

        # Tiny 3-class namespace head (padded to 128 lanes, pad logits -1e30);
        # computed once per half, per-row NLL contribution stored.
        z3 = jnp.dot(hidden, w3_ref[...],
                     preferred_element_type=jnp.float32) + b3_ref[...]
        col3 = jax.lax.broadcasted_iota(jnp.int32, (B, CPAD), 1)
        m3 = jnp.max(z3, axis=1, keepdims=True)
        lse3 = m3 + jnp.log(jnp.sum(jnp.exp(z3 - m3), axis=1, keepdims=True))
        z3t = jnp.sum(jnp.where(col3 == lab_ref[...], z3, 0.0),
                      axis=1, keepdims=True)
        ns_ref[0] = lse3 - z3t


def prepare_params(params, tile_n=8192):
    """One-time layout prep (hoisted out of the per-step path).

    * Transposes the two vocab heads, pads the vocab axis to an even number of
      `tile_n`-wide tiles and block-interleaves W1^T / W2^T into a single
      (E, 2*v_pad) bf16 operand (one DMA stream + one MXU call per step).
    * Fuses the two biases into a small resident (nt, 2*tile_n) f32 slab
      (pad logits forced to -1e30 via the bias).
    * Lane-pads the 3-class namespace head to 128.

    tile_n guidance: ~4096 on v5e, 8192 on v6e, >=8192 (up to 16384) on v7x;
    it is automatically capped for small vocabularies.
    """
    emb = params["embedding"].astype(jnp.float32)
    V, E = emb.shape

    tn = max(128, min(_round_up(tile_n, 128), _round_up(V, 128)))
    nt = _round_up(V, tn) // tn
    if nt % 2:
        nt += 1                      # even tile count -> splits over 2 TCs on v7x
    v_pad = nt * tn

    def pad_head(w, b):
        wt = jnp.zeros((E, v_pad), jnp.float32).at[:, :V].set(jnp.transpose(w))
        br = jnp.full((v_pad,), NEG_BIG, jnp.float32).at[:V].set(b)
        return wt, br

    w1t, b1p = pad_head(params["fc1_w"], params["fc1_b"])
    w2t, b2p = pad_head(params["fc2_w"], params["fc2_b"])

    # Block-interleave: fused tile g = [W1^T tile g | W2^T tile g].
    wf = jnp.stack([w1t.reshape(E, nt, tn), w2t.reshape(E, nt, tn)], axis=2)
    wf = wf.reshape(E, 2 * v_pad).astype(jnp.bfloat16)
    bf = jnp.stack([b1p.reshape(nt, tn), b2p.reshape(nt, tn)], axis=1)
    bf = bf.reshape(nt, 2 * tn)

    w3t = jnp.zeros((E, CPAD), jnp.float32).at[:, :3].set(
        jnp.transpose(params["fc3_w"])).astype(jnp.bfloat16)
    b3r = jnp.full((1, CPAD), NEG_BIG, jnp.float32).at[0, :3].set(params["fc3_b"])

    return {
        "embedding": emb,
        "w_fused": wf, "b_fused": bf,
        "w3t": w3t, "b3r": b3r,
        "vocab_size": V, "embed_size": E,
        "v_pad": v_pad, "tile_n": tn, "num_tiles": nt,
    }


def go_embedder_forward(prepped, term_ids, neighbor_ids, labels):
    """Returns (loss_term, loss_neighbor, loss_namespace) as f32 scalars."""
    E = prepped["embed_size"]
    v_pad = prepped["v_pad"]
    tn = prepped["tile_n"]
    nt = prepped["num_tiles"]
    nt_half = nt // 2
    B = term_ids.shape[0]

    term_sc = term_ids.astype(jnp.int32)          # scalar-prefetched (gather ids)
    term2d = term_sc.reshape(B, 1)
    nbr2d = neighbor_ids.astype(jnp.int32).reshape(B, 1)
    lab2d = labels.astype(jnp.int32).reshape(B, 1)

    def resident(shape):
        return pl.BlockSpec(shape, lambda c, k, ids: (0,) * len(shape))

    w_spec_kwargs = {}
    if nt_half >= 3:
        # Third buffer keeps the HBM engine back-to-back once tiles stream.
        w_spec_kwargs["pipeline_mode"] = pl.Buffered(3)
    w_spec = pl.BlockSpec((E, 2 * tn), lambda c, k, ids: (0, c * nt_half + k),
                          **w_spec_kwargs)

    out_specs = [pl.BlockSpec((1, B, 1), lambda c, k, ids: (c, 0, 0))
                 for _ in range(5)]
    out_shape = tuple(jax.ShapeDtypeStruct((2, B, 1), jnp.float32)
                      for _ in range(5))

    grid_spec = pltpu.PrefetchScalarGridSpec(
        num_scalar_prefetch=1,
        grid=(2, nt_half),
        in_specs=[
            resident((B, 1)),                      # term ids (vector compare)
            resident((B, 1)),                      # neighbor ids
            resident((B, 1)),                      # namespace labels
            pl.BlockSpec(memory_space=pl.ANY),     # embedding table stays in HBM
            w_spec,                                # fused W1|W2 vocab tile (bf16)
            resident((nt, 2 * tn)),                # fused biases (resident, f32)
            resident((E, CPAD)),                   # W3^T (padded, resident)
            resident((1, CPAD)),                   # b3 (padded, resident)
        ],
        out_specs=out_specs,
        scratch_shapes=[
            pltpu.VMEM((B, E), jnp.float32),       # gathered embedding rows
            pltpu.VMEM((B, E), jnp.bfloat16),      # relu(embed), cast once
            pltpu.SemaphoreType.DMA((B,)),         # per-row gather semaphores
            pltpu.VMEM((B, 1), jnp.float32),       # m1
            pltpu.VMEM((B, 1), jnp.float32),       # l1
            pltpu.VMEM((B, 1), jnp.float32),       # t1 (picked target logit)
            pltpu.VMEM((B, 1), jnp.float32),       # m2
            pltpu.VMEM((B, 1), jnp.float32),       # l2
            pltpu.VMEM((B, 1), jnp.float32),       # t2
        ],
    )

    flops = 2 * B * E * (2 * v_pad) + 2 * (2 * B * E * CPAD)
    weight_bytes = E * 2 * v_pad * 2 + nt * 2 * tn * 4 + E * CPAD * 2 + CPAD * 4
    cost = pl.CostEstimate(
        flops=flops,
        transcendentals=2 * B * v_pad + 2 * B * CPAD,
        bytes_accessed=weight_bytes + B * E * 4 + 3 * B * 4,
    )

    lse1, tz1, lse2, tz2, ns = pl.pallas_call(
        functools.partial(_go_embedder_kernel, nt_half, tn),
        out_shape=out_shape,
        grid_spec=grid_spec,
        compiler_params=pltpu.CompilerParams(
            # Leading axis: vocab halves -> both TensorCores on v7x.
            # Trailing axis: sequential online-softmax reduction over tiles.
            dimension_semantics=("parallel", "arbitrary"),
            vmem_limit_bytes=32 * 1024 * 1024),
        cost_estimate=cost,
    )(term_sc, term2d, nbr2d, lab2d, prepped["embedding"],
      prepped["w_fused"], prepped["b_fused"], prepped["w3t"], prepped["b3r"])

    # Combine the two vocab halves (a few hundred bytes; fused by jit).
    lse_t = jnp.logaddexp(lse1[0], lse1[1])
    lse_n = jnp.logaddexp(lse2[0], lse2[1])
    loss_term = jnp.mean(lse_t - (tz1[0] + tz1[1]))
    loss_neighbor = jnp.mean(lse_n - (tz2[0] + tz2[1]))
    loss_namespace = jnp.mean(ns[0])
    return loss_term, loss_neighbor, loss_namespace


def init_params(key, vocab_size, embed_size):
    """Deterministic init mirroring GoEmbedder.init_weights():
       embedding ~ N(0,1) (PyTorch default), everything else ~ U(-0.1, 0.1)."""
    k_emb, k1w, k1b, k2w, k2b, k3w, k3b = jax.random.split(key, 7)
    u = lambda k, shape: jax.random.uniform(k, shape, jnp.float32, -0.1, 0.1)
    return {
        "embedding": jax.random.normal(k_emb, (vocab_size, embed_size), jnp.float32),
        "fc1_w": u(k1w, (vocab_size, embed_size)), "fc1_b": u(k1b, (vocab_size,)),
        "fc2_w": u(k2w, (vocab_size, embed_size)), "fc2_b": u(k2b, (vocab_size,)),
        "fc3_w": u(k3w, (3, embed_size)),          "fc3_b": u(k3b, (3,)),
    }


def _reference(params, term_ids, neighbor_ids, labels, use_bf16):
    emb = jnp.take(params["embedding"], term_ids, axis=0)
    hidden = jnp.maximum(emb, 0.0)
    if use_bf16:
        hidden = hidden.astype(jnp.bfloat16)
        cast = lambda w: w.astype(jnp.bfloat16)
    else:
        cast = lambda w: w
    dot = lambda a, b: jnp.dot(a, b, preferred_element_type=jnp.float32)
    out1 = dot(hidden, cast(params["fc1_w"]).T) + params["fc1_b"]
    out2 = dot(hidden, cast(params["fc2_w"]).T) + params["fc2_b"]
    out3 = dot(hidden, cast(params["fc3_w"]).T) + params["fc3_b"]
    lp1 = jax.nn.log_softmax(out1, axis=1)
    lp2 = jax.nn.log_softmax(out2, axis=1)
    lp3 = jax.nn.log_softmax(out3, axis=1)
    rows = jnp.arange(term_ids.shape[0])
    return (-lp1[rows, term_ids].mean(),
            -lp2[rows, neighbor_ids].mean(),
            -lp3[rows, labels].mean())


if __name__ == "__main__":
    VOCAB, EMBED, BATCH = 1000, 32, 8   # V not a multiple of 128 -> exercises padding

    key = jax.random.PRNGKey(0)
    kp, kt, kn, kl = jax.random.split(key, 4)

    params = init_params(kp, VOCAB, EMBED)
    term_ids = jax.random.randint(kt, (BATCH,), 0, VOCAB, jnp.int32)
    neighbor_ids = jax.random.randint(kn, (BATCH,), 0, VOCAB, jnp.int32)
    labels = jax.random.randint(kl, (BATCH,), 0, 3, jnp.int32)

    ref_bf16 = _reference(params, term_ids, neighbor_ids, labels, use_bf16=True)
    ref_f32 = _reference(params, term_ids, neighbor_ids, labels, use_bf16=False)

    # Config A (tile_n=256): multi-step online-softmax reduction per core half.
    # Config B (default 8192, auto-capped): one real half + one all-pad half.
    for tile_n in (256, 8192):
        prepped = prepare_params(params, tile_n=tile_n)
        fwd = jax.jit(functools.partial(go_embedder_forward, prepped))
        losses = jax.block_until_ready(fwd(term_ids, neighbor_ids, labels))

        # Tight check against a reference using the same bf16 matmul operands.
        for got, want in zip(losses, ref_bf16):
            assert jnp.allclose(got, want, rtol=5e-3, atol=5e-3), (tile_n, got, want)
        # Loose sanity check against the pure-f32 PyTorch-equivalent math.
        for got, want in zip(losses, ref_f32):
            assert jnp.allclose(got, want, rtol=5e-2, atol=5e-2), (tile_n, got, want)

    print("KERNEL_OK")
</pallas_src>

<mosaic_0001>
module attributes {stable_mosaic.version = 11 : i64} {
  func.func @_go_embedder_kernel(%arg0: i32, %arg1: i32, %arg2: memref<8xi32, #tpu.memory_space<smem>>, %arg3: memref<8x1xi32, #tpu.memory_space<vmem>>, %arg4: memref<8x1xi32, #tpu.memory_space<vmem>>, %arg5: memref<8x1xi32, #tpu.memory_space<vmem>>, %arg6: memref<1000x32xf32, #tpu.memory_space<any>>, %arg7: memref<32x512xbf16, #tpu.memory_space<vmem>>, %arg8: memref<4x512xf32, #tpu.memory_space<vmem>>, %arg9: memref<32x128xbf16, #tpu.memory_space<vmem>>, %arg10: memref<1x128xf32, #tpu.memory_space<vmem>>, %arg11: memref<1x8x1xf32, #tpu.memory_space<vmem>>, %arg12: memref<1x8x1xf32, #tpu.memory_space<vmem>>, %arg13: memref<1x8x1xf32, #tpu.memory_space<vmem>>, %arg14: memref<1x8x1xf32, #tpu.memory_space<vmem>>, %arg15: memref<1x8x1xf32, #tpu.memory_space<vmem>>, %arg16: memref<8x32xf32, #tpu.memory_space<vmem>>, %arg17: memref<8x32xbf16, #tpu.memory_space<vmem>>, %arg18: memref<8x!tpu.dma_semaphore, #tpu.memory_space<semaphore_mem>>, %arg19: memref<8x1xf32, #tpu.memory_space<vmem>>, %arg20: memref<8x1xf32, #tpu.memory_space<vmem>>, %arg21: memref<8x1xf32, #tpu.memory_space<vmem>>, %arg22: memref<8x1xf32, #tpu.memory_space<vmem>>, %arg23: memref<8x1xf32, #tpu.memory_space<vmem>>, %arg24: memref<8x1xf32, #tpu.memory_space<vmem>>) attributes {dimension_semantics = [#tpu.dimension_semantics<parallel>, #tpu.dimension_semantics<arbitrary>], iteration_bounds = array<i64: 2, 2>, scalar_prefetch = 1 : i64, scratch_operands = 9 : i64, tpu.core_type = #tpu.core_type<tc>, window_params = [{pipeline_mode = #tpu.pipeline_mode<synchronous>, transform_indices = @transform_0, window_bounds = array<i64: 8, 1>}, {pipeline_mode = #tpu.pipeline_mode<synchronous>, transform_indices = @transform_1, window_bounds = array<i64: 8, 1>}, {pipeline_mode = #tpu.pipeline_mode<synchronous>, transform_indices = @transform_2, window_bounds = array<i64: 8, 1>}, {}, {transform_indices = @transform_4, window_bounds = array<i64: 32, 512>}, {pipeline_mode = #tpu.pipeline_mode<synchronous>, transform_indices = @transform_5, window_bounds = array<i64: 4, 512>}, {pipeline_mode = #tpu.pipeline_mode<synchronous>, transform_indices = @transform_6, window_bounds = array<i64: 32, 128>}, {pipeline_mode = #tpu.pipeline_mode<synchronous>, transform_indices = @transform_7, window_bounds = array<i64: 1, 128>}, {transform_indices = @transform_8, window_bounds = array<i64: 1, 8, 1>}, {transform_indices = @transform_9, window_bounds = array<i64: 1, 8, 1>}, {transform_indices = @transform_10, window_bounds = array<i64: 1, 8, 1>}, {transform_indices = @transform_11, window_bounds = array<i64: 1, 8, 1>}, {transform_indices = @transform_12, window_bounds = array<i64: 1, 8, 1>}]} {
    %c2_i32 = arith.constant 2 : i32
    %0 = arith.muli %arg0, %c2_i32 : i32
    %1 = arith.addi %0, %arg1 : i32
    %c0_i32 = arith.constant 0 : i32
    %2 = arith.cmpi eq, %arg1, %c0_i32 : i32
    %3 = arith.extui %2 : i1 to i32
    %c0_i32_0 = arith.constant 0 : i32
    %4 = arith.cmpi ne, %3, %c0_i32_0 : i32
    scf.if %4 {
      %c0_46 = arith.constant 0 : index
      %75 = memref.load %arg2[%c0_46] : memref<8xi32, #tpu.memory_space<smem>>
      %c0_i32_47 = arith.constant 0 : i32
      %c0_i32_48 = arith.constant 0 : i32
      %76 = tpu.memref_slice %arg6[%75, %c0_i32_48] : memref<1000x32xf32, #tpu.memory_space<any>> -> memref<1x32xf32, #tpu.memory_space<any>>
      %c0_i32_49 = arith.constant 0 : i32
      %c0_i32_50 = arith.constant 0 : i32
      %77 = tpu.memref_slice %arg16[%c0_i32_49, %c0_i32_50] : memref<8x32xf32, #tpu.memory_space<vmem>> -> memref<1x32xf32, #tpu.memory_space<vmem>>
      %78 = tpu.memref_slice %arg18[%c0_i32_47] : memref<8x!tpu.dma_semaphore, #tpu.memory_space<semaphore_mem>> -> memref<1x!tpu.dma_semaphore, #tpu.memory_space<semaphore_mem>>
      %79 = tpu.memref_squeeze %78 : memref<1x!tpu.dma_semaphore, #tpu.memory_space<semaphore_mem>> -> memref<!tpu.dma_semaphore, #tpu.memory_space<semaphore_mem>>
      tpu.enqueue_dma source(%76 : memref<1x32xf32, #tpu.memory_space<any>>) target(%77 : memref<1x32xf32, #tpu.memory_space<vmem>>) target_semaphore(%79 : memref<!tpu.dma_semaphore, #tpu.memory_space<semaphore_mem>>)
      %c1 = arith.constant 1 : index
      %80 = memref.load %arg2[%c1] : memref<8xi32, #tpu.memory_space<smem>>
      %c1_i32_51 = arith.constant 1 : i32
      %c0_i32_52 = arith.constant 0 : i32
      %81 = tpu.memref_slice %arg6[%80, %c0_i32_52] : memref<1000x32xf32, #tpu.memory_space<any>> -> memref<1x32xf32, #tpu.memory_space<any>>
      %c1_i32_53 = arith.constant 1 : i32
      %c0_i32_54 = arith.constant 0 : i32
      %82 = tpu.memref_slice %arg16[%c1_i32_53, %c0_i32_54] : memref<8x32xf32, #tpu.memory_space<vmem>> -> memref<1x32xf32, #tpu.memory_space<vmem>>
      %83 = tpu.memref_slice %arg18[%c1_i32_51] : memref<8x!tpu.dma_semaphore, #tpu.memory_space<semaphore_mem>> -> memref<1x!tpu.dma_semaphore, #tpu.memory_space<semaphore_mem>>
      %84 = tpu.memref_squeeze %83 : memref<1x!tpu.dma_semaphore, #tpu.memory_space<semaphore_mem>> -> memref<!tpu.dma_semaphore, #tpu.memory_space<semaphore_mem>>
      tpu.enqueue_dma source(%81 : memref<1x32xf32, #tpu.memory_space<any>>) target(%82 : memref<1x32xf32, #tpu.memory_space<vmem>>) target_semaphore(%84 : memref<!tpu.dma_semaphore, #tpu.memory_space<semaphore_mem>>)
      %c2 = arith.constant 2 : index
      %85 = memref.load %arg2[%c2] : memref<8xi32, #tpu.memory_space<smem>>
      %c2_i32_55 = arith.constant 2 : i32
      %c0_i32_56 = arith.constant 0 : i32
      %86 = tpu.memref_slice %arg6[%85, %c0_i32_56] : memref<1000x32xf32, #tpu.memory_space<any>> -> memref<1x32xf32, #tpu.memory_space<any>>
      %c2_i32_57 = arith.constant 2 : i32
      %c0_i32_58 = arith.constant 0 : i32
      %87 = tpu.memref_slice %arg16[%c2_i32_57, %c0_i32_58] : memref<8x32xf32, #tpu.memory_space<vmem>> -> memref<1x32xf32, #tpu.memory_space<vmem>>
      %88 = tpu.memref_slice %arg18[%c2_i32_55] : memref<8x!tpu.dma_semaphore, #tpu.memory_space<semaphore_mem>> -> memref<1x!tpu.dma_semaphore, #tpu.memory_space<semaphore_mem>>
      %89 = tpu.memref_squeeze %88 : memref<1x!tpu.dma_semaphore, #tpu.memory_space<semaphore_mem>> -> memref<!tpu.dma_semaphore, #tpu.memory_space<semaphore_mem>>
      tpu.enqueue_dma source(%86 : memref<1x32xf32, #tpu.memory_space<any>>) target(%87 : memref<1x32xf32, #tpu.memory_space<vmem>>) target_semaphore(%89 : memref<!tpu.dma_semaphore, #tpu.memory_space<semaphore_mem>>)
      %c3 = arith.constant 3 : index
      %90 = memref.load %arg2[%c3] : memref<8xi32, #tpu.memory_space<smem>>
      %c3_i32 = arith.constant 3 : i32
      %c0_i32_59 = arith.constant 0 : i32
      %91 = tpu.memref_slice %arg6[%90, %c0_i32_59] : memref<1000x32xf32, #tpu.memory_space<any>> -> memref<1x32xf32, #tpu.memory_space<any>>
      %c3_i32_60 = arith.constant 3 : i32
      %c0_i32_61 = arith.constant 0 : i32
      %92 = tpu.memref_slice %arg16[%c3_i32_60, %c0_i32_61] : memref<8x32xf32, #tpu.memory_space<vmem>> -> memref<1x32xf32, #tpu.memory_space<vmem>>
      %93 = tpu.memref_slice %arg18[%c3_i32] : memref<8x!tpu.dma_semaphore, #tpu.memory_space<semaphore_mem>> -> memref<1x!tpu.dma_semaphore, #tpu.memory_space<semaphore_mem>>
      %94 = tpu.memref_squeeze %93 : memref<1x!tpu.dma_semaphore, #tpu.memory_space<semaphore_mem>> -> memref<!tpu.dma_semaphore, #tpu.memory_space<semaphore_mem>>
      tpu.enqueue_dma source(%91 : memref<1x32xf32, #tpu.memory_space<any>>) target(%92 : memref<1x32xf32, #tpu.memory_space<vmem>>) target_semaphore(%94 : memref<!tpu.dma_semaphore, #tpu.memory_space<semaphore_mem>>)
      %c4 = arith.constant 4 : index
      %95 = memref.load %arg2[%c4] : memref<8xi32, #tpu.memory_space<smem>>
      %c4_i32 = arith.constant 4 : i32
      %c0_i32_62 = arith.constant 0 : i32
      %96 = tpu.memref_slice %arg6[%95, %c0_i32_62] : memref<1000x32xf32, #tpu.memory_space<any>> -> memref<1x32xf32, #tpu.memory_space<any>>
      %c4_i32_63 = arith.constant 4 : i32
      %c0_i32_64 = arith.constant 0 : i32
      %97 = tpu.memref_slice %arg16[%c4_i32_63, %c0_i32_64] : memref<8x32xf32, #tpu.memory_space<vmem>> -> memref<1x32xf32, #tpu.memory_space<vmem>>
      %98 = tpu.memref_slice %arg18[%c4_i32] : memref<8x!tpu.dma_semaphore, #tpu.memory_space<semaphore_mem>> -> memref<1x!tpu.dma_semaphore, #tpu.memory_space<semaphore_mem>>
      %99 = tpu.memref_squeeze %98 : memref<1x!tpu.dma_semaphore, #tpu.memory_space<semaphore_mem>> -> memref<!tpu.dma_semaphore, #tpu.memory_space<semaphore_mem>>
      tpu.enqueue_dma source(%96 : memref<1x32xf32, #tpu.memory_space<any>>) target(%97 : memref<1x32xf32, #tpu.memory_space<vmem>>) target_semaphore(%99 : memref<!tpu.dma_semaphore, #tpu.memory_space<semaphore_mem>>)
      %c5 = arith.constant 5 : index
      %100 = memref.load %arg2[%c5] : memref<8xi32, #tpu.memory_space<smem>>
      %c5_i32 = arith.constant 5 : i32
      %c0_i32_65 = arith.constant 0 : i32
      %101 = tpu.memref_slice %arg6[%100, %c0_i32_65] : memref<1000x32xf32, #tpu.memory_space<any>> -> memref<1x32xf32, #tpu.memory_space<any>>
      %c5_i32_66 = arith.constant 5 : i32
      %c0_i32_67 = arith.constant 0 : i32
      %102 = tpu.memref_slice %arg16[%c5_i32_66, %c0_i32_67] : memref<8x32xf32, #tpu.memory_space<vmem>> -> memref<1x32xf32, #tpu.memory_space<vmem>>
      %103 = tpu.memref_slice %arg18[%c5_i32] : memref<8x!tpu.dma_semaphore, #tpu.memory_space<semaphore_mem>> -> memref<1x!tpu.dma_semaphore, #tpu.memory_space<semaphore_mem>>
      %104 = tpu.memref_squeeze %103 : memref<1x!tpu.dma_semaphore, #tpu.memory_space<semaphore_mem>> -> memref<!tpu.dma_semaphore, #tpu.memory_space<semaphore_mem>>
      tpu.enqueue_dma source(%101 : memref<1x32xf32, #tpu.memory_space<any>>) target(%102 : memref<1x32xf32, #tpu.memory_space<vmem>>) target_semaphore(%104 : memref<!tpu.dma_semaphore, #tpu.memory_space<semaphore_mem>>)
      %c6 = arith.constant 6 : index
      %105 = memref.load %arg2[%c6] : memref<8xi32, #tpu.memory_space<smem>>
      %c6_i32 = arith.constant 6 : i32
      %c0_i32_68 = arith.constant 0 : i32
      %106 = tpu.memref_slice %arg6[%105, %c0_i32_68] : memref<1000x32xf32, #tpu.memory_space<any>> -> memref<1x32xf32, #tpu.memory_space<any>>
      %c6_i32_69 = arith.constant 6 : i32
      %c0_i32_70 = arith.constant 0 : i32
      %107 = tpu.memref_slice %arg16[%c6_i32_69, %c0_i32_70] : memref<8x32xf32, #tpu.memory_space<vmem>> -> memref<1x32xf32, #tpu.memory_space<vmem>>
      %108 = tpu.memref_slice %arg18[%c6_i32] : memref<8x!tpu.dma_semaphore, #tpu.memory_space<semaphore_mem>> -> memref<1x!tpu.dma_semaphore, #tpu.memory_space<semaphore_mem>>
      %109 = tpu.memref_squeeze %108 : memref<1x!tpu.dma_semaphore, #tpu.memory_space<semaphore_mem>> -> memref<!tpu.dma_semaphore, #tpu.memory_space<semaphore_mem>>
      tpu.enqueue_dma source(%106 : memref<1x32xf32, #tpu.memory_space<any>>) target(%107 : memref<1x32xf32, #tpu.memory_space<vmem>>) target_semaphore(%109 : memref<!tpu.dma_semaphore, #tpu.memory_space<semaphore_mem>>)
      %c7 = arith.constant 7 : index
      %110 = memref.load %arg2[%c7] : memref<8xi32, #tpu.memory_space<smem>>
      %c7_i32 = arith.constant 7 : i32
      %c0_i32_71 = arith.constant 0 : i32
      %111 = tpu.memref_slice %arg6[%110, %c0_i32_71] : memref<1000x32xf32, #tpu.memory_space<any>> -> memref<1x32xf32, #tpu.memory_space<any>>
      %c7_i32_72 = arith.constant 7 : i32
      %c0_i32_73 = arith.constant 0 : i32
      %112 = tpu.memref_slice %arg16[%c7_i32_72, %c0_i32_73] : memref<8x32xf32, #tpu.memory_space<vmem>> -> memref<1x32xf32, #tpu.memory_space<vmem>>
      %113 = tpu.memref_slice %arg18[%c7_i32] : memref<8x!tpu.dma_semaphore, #tpu.memory_space<semaphore_mem>> -> memref<1x!tpu.dma_semaphore, #tpu.memory_space<semaphore_mem>>
      %114 = tpu.memref_squeeze %113 : memref<1x!tpu.dma_semaphore, #tpu.memory_space<semaphore_mem>> -> memref<!tpu.dma_semaphore, #tpu.memory_space<semaphore_mem>>
      tpu.enqueue_dma source(%111 : memref<1x32xf32, #tpu.memory_space<any>>) target(%112 : memref<1x32xf32, #tpu.memory_space<vmem>>) target_semaphore(%114 : memref<!tpu.dma_semaphore, #tpu.memory_space<semaphore_mem>>)
      %c0_74 = arith.constant 0 : index
      %115 = memref.load %arg2[%c0_74] : memref<8xi32, #tpu.memory_space<smem>>
      %c0_i32_75 = arith.constant 0 : i32
      %c0_i32_76 = arith.constant 0 : i32
      %116 = tpu.memref_slice %arg6[%115, %c0_i32_76] : memref<1000x32xf32, #tpu.memory_space<any>> -> memref<1x32xf32, #tpu.memory_space<any>>
      %c0_i32_77 = arith.constant 0 : i32
      %c0_i32_78 = arith.constant 0 : i32
      %117 = tpu.memref_slice %arg16[%c0_i32_77, %c0_i32_78] : memref<8x32xf32, #tpu.memory_space<vmem>> -> memref<1x32xf32, #tpu.memory_space<vmem>>
      %118 = tpu.memref_slice %arg18[%c0_i32_75] : memref<8x!tpu.dma_semaphore, #tpu.memory_space<semaphore_mem>> -> memref<1x!tpu.dma_semaphore, #tpu.memory_space<semaphore_mem>>
      %119 = tpu.memref_squeeze %118 : memref<1x!tpu.dma_semaphore, #tpu.memory_space<semaphore_mem>> -> memref<!tpu.dma_semaphore, #tpu.memory_space<semaphore_mem>>
      tpu.wait_dma2 semaphore(%119 : memref<!tpu.dma_semaphore, #tpu.memory_space<semaphore_mem>>) src(%116 : memref<1x32xf32, #tpu.memory_space<any>>) dst(%117 : memref<1x32xf32, #tpu.memory_space<vmem>>)
      %c1_79 = arith.constant 1 : index
      %120 = memref.load %arg2[%c1_79] : memref<8xi32, #tpu.memory_space<smem>>
      %c1_i32_80 = arith.constant 1 : i32
      %c0_i32_81 = arith.constant 0 : i32
      %121 = tpu.memref_slice %arg6[%120, %c0_i32_81] : memref<1000x32xf32, #tpu.memory_space<any>> -> memref<1x32xf32, #tpu.memory_space<any>>
      %c1_i32_82 = arith.constant 1 : i32
      %c0_i32_83 = arith.constant 0 : i32
      %122 = tpu.memref_slice %arg16[%c1_i32_82, %c0_i32_83] : memref<8x32xf32, #tpu.memory_space<vmem>> -> memref<1x32xf32, #tpu.memory_space<vmem>>
      %123 = tpu.memref_slice %arg18[%c1_i32_80] : memref<8x!tpu.dma_semaphore, #tpu.memory_space<semaphore_mem>> -> memref<1x!tpu.dma_semaphore, #tpu.memory_space<semaphore_mem>>
      %124 = tpu.memref_squeeze %123 : memref<1x!tpu.dma_semaphore, #tpu.memory_space<semaphore_mem>> -> memref<!tpu.dma_semaphore, #tpu.memory_space<semaphore_mem>>
      tpu.wait_dma2 semaphore(%124 : memref<!tpu.dma_semaphore, #tpu.memory_space<semaphore_mem>>) src(%121 : memref<1x32xf32, #tpu.memory_space<any>>) dst(%122 : memref<1x32xf32, #tpu.memory_space<vmem>>)
      %c2_84 = arith.constant 2 : index
      %125 = memref.load %arg2[%c2_84] : memref<8xi32, #tpu.memory_space<smem>>
      %c2_i32_85 = arith.constant 2 : i32
      %c0_i32_86 = arith.constant 0 : i32
      %126 = tpu.memref_slice %arg6[%125, %c0_i32_86] : memref<1000x32xf32, #tpu.memory_space<any>> -> memref<1x32xf32, #tpu.memory_space<any>>
      %c2_i32_87 = arith.constant 2 : i32
      %c0_i32_88 = arith.constant 0 : i32
      %127 = tpu.memref_slice %arg16[%c2_i32_87, %c0_i32_88] : memref<8x32xf32, #tpu.memory_space<vmem>> -> memref<1x32xf32, #tpu.memory_space<vmem>>
      %128 = tpu.memref_slice %arg18[%c2_i32_85] : memref<8x!tpu.dma_semaphore, #tpu.memory_space<semaphore_mem>> -> memref<1x!tpu.dma_semaphore, #tpu.memory_space<semaphore_mem>>
      %129 = tpu.memref_squeeze %128 : memref<1x!tpu.dma_semaphore, #tpu.memory_space<semaphore_mem>> -> memref<!tpu.dma_semaphore, #tpu.memory_space<semaphore_mem>>
      tpu.wait_dma2 semaphore(%129 : memref<!tpu.dma_semaphore, #tpu.memory_space<semaphore_mem>>) src(%126 : memref<1x32xf32, #tpu.memory_space<any>>) dst(%127 : memref<1x32xf32, #tpu.memory_space<vmem>>)
      %c3_89 = arith.constant 3 : index
      %130 = memref.load %arg2[%c3_89] : memref<8xi32, #tpu.memory_space<smem>>
      %c3_i32_90 = arith.constant 3 : i32
      %c0_i32_91 = arith.constant 0 : i32
      %131 = tpu.memref_slice %arg6[%130, %c0_i32_91] : memref<1000x32xf32, #tpu.memory_space<any>> -> memref<1x32xf32, #tpu.memory_space<any>>
      %c3_i32_92 = arith.constant 3 : i32
      %c0_i32_93 = arith.constant 0 : i32
      %132 = tpu.memref_slice %arg16[%c3_i32_92, %c0_i32_93] : memref<8x32xf32, #tpu.memory_space<vmem>> -> memref<1x32xf32, #tpu.memory_space<vmem>>
      %133 = tpu.memref_slice %arg18[%c3_i32_90] : memref<8x!tpu.dma_semaphore, #tpu.memory_space<semaphore_mem>> -> memref<1x!tpu.dma_semaphore, #tpu.memory_space<semaphore_mem>>
      %134 = tpu.memref_squeeze %133 : memref<1x!tpu.dma_semaphore, #tpu.memory_space<semaphore_mem>> -> memref<!tpu.dma_semaphore, #tpu.memory_space<semaphore_mem>>
      tpu.wait_dma2 semaphore(%134 : memref<!tpu.dma_semaphore, #tpu.memory_space<semaphore_mem>>) src(%131 : memref<1x32xf32, #tpu.memory_space<any>>) dst(%132 : memref<1x32xf32, #tpu.memory_space<vmem>>)
      %c4_94 = arith.constant 4 : index
      %135 = memref.load %arg2[%c4_94] : memref<8xi32, #tpu.memory_space<smem>>
      %c4_i32_95 = arith.constant 4 : i32
      %c0_i32_96 = arith.constant 0 : i32
      %136 = tpu.memref_slice %arg6[%135, %c0_i32_96] : memref<1000x32xf32, #tpu.memory_space<any>> -> memref<1x32xf32, #tpu.memory_space<any>>
      %c4_i32_97 = arith.constant 4 : i32
      %c0_i32_98 = arith.constant 0 : i32
      %137 = tpu.memref_slice %arg16[%c4_i32_97, %c0_i32_98] : memref<8x32xf32, #tpu.memory_space<vmem>> -> memref<1x32xf32, #tpu.memory_space<vmem>>
      %138 = tpu.memref_slice %arg18[%c4_i32_95] : memref<8x!tpu.dma_semaphore, #tpu.memory_space<semaphore_mem>> -> memref<1x!tpu.dma_semaphore, #tpu.memory_space<semaphore_mem>>
      %139 = tpu.memref_squeeze %138 : memref<1x!tpu.dma_semaphore, #tpu.memory_space<semaphore_mem>> -> memref<!tpu.dma_semaphore, #tpu.memory_space<semaphore_mem>>
      tpu.wait_dma2 semaphore(%139 : memref<!tpu.dma_semaphore, #tpu.memory_space<semaphore_mem>>) src(%136 : memref<1x32xf32, #tpu.memory_space<any>>) dst(%137 : memref<1x32xf32, #tpu.memory_space<vmem>>)
      %c5_99 = arith.constant 5 : index
      %140 = memref.load %arg2[%c5_99] : memref<8xi32, #tpu.memory_space<smem>>
      %c5_i32_100 = arith.constant 5 : i32
      %c0_i32_101 = arith.constant 0 : i32
      %141 = tpu.memref_slice %arg6[%140, %c0_i32_101] : memref<1000x32xf32, #tpu.memory_space<any>> -> memref<1x32xf32, #tpu.memory_space<any>>
      %c5_i32_102 = arith.constant 5 : i32
      %c0_i32_103 = arith.constant 0 : i32
      %142 = tpu.memref_slice %arg16[%c5_i32_102, %c0_i32_103] : memref<8x32xf32, #tpu.memory_space<vmem>> -> memref<1x32xf32, #tpu.memory_space<vmem>>
      %143 = tpu.memref_slice %arg18[%c5_i32_100] : memref<8x!tpu.dma_semaphore, #tpu.memory_space<semaphore_mem>> -> memref<1x!tpu.dma_semaphore, #tpu.memory_space<semaphore_mem>>
      %144 = tpu.memref_squeeze %143 : memref<1x!tpu.dma_semaphore, #tpu.memory_space<semaphore_mem>> -> memref<!tpu.dma_semaphore, #tpu.memory_space<semaphore_mem>>
      tpu.wait_dma2 semaphore(%144 : memref<!tpu.dma_semaphore, #tpu.memory_space<semaphore_mem>>) src(%141 : memref<1x32xf32, #tpu.memory_space<any>>) dst(%142 : memref<1x32xf32, #tpu.memory_space<vmem>>)
      %c6_104 = arith.constant 6 : index
      %145 = memref.load %arg2[%c6_104] : memref<8xi32, #tpu.memory_space<smem>>
      %c6_i32_105 = arith.constant 6 : i32
      %c0_i32_106 = arith.constant 0 : i32
      %146 = tpu.memref_slice %arg6[%145, %c0_i32_106] : memref<1000x32xf32, #tpu.memory_space<any>> -> memref<1x32xf32, #tpu.memory_space<any>>
      %c6_i32_107 = arith.constant 6 : i32
      %c0_i32_108 = arith.constant 0 : i32
      %147 = tpu.memref_slice %arg16[%c6_i32_107, %c0_i32_108] : memref<8x32xf32, #tpu.memory_space<vmem>> -> memref<1x32xf32, #tpu.memory_space<vmem>>
      %148 = tpu.memref_slice %arg18[%c6_i32_105] : memref<8x!tpu.dma_semaphore, #tpu.memory_space<semaphore_mem>> -> memref<1x!tpu.dma_semaphore, #tpu.memory_space<semaphore_mem>>
      %149 = tpu.memref_squeeze %148 : memref<1x!tpu.dma_semaphore, #tpu.memory_space<semaphore_mem>> -> memref<!tpu.dma_semaphore, #tpu.memory_space<semaphore_mem>>
      tpu.wait_dma2 semaphore(%149 : memref<!tpu.dma_semaphore, #tpu.memory_space<semaphore_mem>>) src(%146 : memref<1x32xf32, #tpu.memory_space<any>>) dst(%147 : memref<1x32xf32, #tpu.memory_space<vmem>>)
      %c7_109 = arith.constant 7 : index
      %150 = memref.load %arg2[%c7_109] : memref<8xi32, #tpu.memory_space<smem>>
      %c7_i32_110 = arith.constant 7 : i32
      %c0_i32_111 = arith.constant 0 : i32
      %151 = tpu.memref_slice %arg6[%150, %c0_i32_111] : memref<1000x32xf32, #tpu.memory_space<any>> -> memref<1x32xf32, #tpu.memory_space<any>>
      %c7_i32_112 = arith.constant 7 : i32
      %c0_i32_113 = arith.constant 0 : i32
      %152 = tpu.memref_slice %arg16[%c7_i32_112, %c0_i32_113] : memref<8x32xf32, #tpu.memory_space<vmem>> -> memref<1x32xf32, #tpu.memory_space<vmem>>
      %153 = tpu.memref_slice %arg18[%c7_i32_110] : memref<8x!tpu.dma_semaphore, #tpu.memory_space<semaphore_mem>> -> memref<1x!tpu.dma_semaphore, #tpu.memory_space<semaphore_mem>>
      %154 = tpu.memref_squeeze %153 : memref<1x!tpu.dma_semaphore, #tpu.memory_space<semaphore_mem>> -> memref<!tpu.dma_semaphore, #tpu.memory_space<semaphore_mem>>
      tpu.wait_dma2 semaphore(%154 : memref<!tpu.dma_semaphore, #tpu.memory_space<semaphore_mem>>) src(%151 : memref<1x32xf32, #tpu.memory_space<any>>) dst(%152 : memref<1x32xf32, #tpu.memory_space<vmem>>)
      %c0_114 = arith.constant 0 : index
      %c0_115 = arith.constant 0 : index
      %155 = vector.load %arg16[%c0_114, %c0_115] : memref<8x32xf32, #tpu.memory_space<vmem>>, vector<8x32xf32>
      %cst_116 = arith.constant 0.000000e+00 : f32
      %156 = vector.broadcast %cst_116 : f32 to vector<8x32xf32>
      %157 = arith.maximumf %155, %156 : vector<8x32xf32>
      %158 = arith.truncf %157 : vector<8x32xf32> to vector<8x32xbf16>
      %c0_117 = arith.constant 0 : index
      %c0_118 = arith.constant 0 : index
      %159 = vector.load %arg17[%c0_117, %c0_118] : memref<8x32xbf16, #tpu.memory_space<vmem>>, vector<8x32xbf16>
      tpu.vector_store %arg17[%c0_117, %c0_118], %158 {strides = array<i32>} : memref<8x32xbf16, #tpu.memory_space<vmem>>, vector<8x32xbf16>,
      %cst_119 = arith.constant -1.000000e+30 : f32
      %160 = vector.broadcast %cst_119 : f32 to vector<8x1xf32>
      %c0_120 = arith.constant 0 : index
      %c0_121 = arith.constant 0 : index
      %161 = vector.load %arg19[%c0_120, %c0_121] : memref<8x1xf32, #tpu.memory_space<vmem>>, vector<8x1xf32>
      tpu.vector_store %arg19[%c0_120, %c0_121], %160 {strides = array<i32>} : memref<8x1xf32, #tpu.memory_space<vmem>>, vector<8x1xf32>,
      %cst_122 = arith.constant -1.000000e+30 : f32
      %162 = vector.broadcast %cst_122 : f32 to vector<8x1xf32>
      %c0_123 = arith.constant 0 : index
      %c0_124 = arith.constant 0 : index
      %163 = vector.load %arg22[%c0_123, %c0_124] : memref<8x1xf32, #tpu.memory_space<vmem>>, vector<8x1xf32>
      tpu.vector_store %arg22[%c0_123, %c0_124], %162 {strides = array<i32>} : memref<8x1xf32, #tpu.memory_space<vmem>>, vector<8x1xf32>,
      %cst_125 = arith.constant 0.000000e+00 : f32
      %164 = vector.broadcast %cst_125 : f32 to vector<8x1xf32>
      %c0_126 = arith.constant 0 : index
      %c0_127 = arith.constant 0 : index
      %165 = vector.load %arg20[%c0_126, %c0_127] : memref<8x1xf32, #tpu.memory_space<vmem>>, vector<8x1xf32>
      tpu.vector_store %arg20[%c0_126, %c0_127], %164 {strides = array<i32>} : memref<8x1xf32, #tpu.memory_space<vmem>>, vector<8x1xf32>,
      %cst_128 = arith.constant 0.000000e+00 : f32
      %166 = vector.broadcast %cst_128 : f32 to vector<8x1xf32>
      %c0_129 = arith.constant 0 : index
      %c0_130 = arith.constant 0 : index
      %167 = vector.load %arg23[%c0_129, %c0_130] : memref<8x1xf32, #tpu.memory_space<vmem>>, vector<8x1xf32>
      tpu.vector_store %arg23[%c0_129, %c0_130], %166 {strides = array<i32>} : memref<8x1xf32, #tpu.memory_space<vmem>>, vector<8x1xf32>,
      %cst_131 = arith.constant 0.000000e+00 : f32
      %168 = vector.broadcast %cst_131 : f32 to vector<8x1xf32>
      %c0_132 = arith.constant 0 : index
      %c0_133 = arith.constant 0 : index
      %169 = vector.load %arg21[%c0_132, %c0_133] : memref<8x1xf32, #tpu.memory_space<vmem>>, vector<8x1xf32>
      tpu.vector_store %arg21[%c0_132, %c0_133], %168 {strides = array<i32>} : memref<8x1xf32, #tpu.memory_space<vmem>>, vector<8x1xf32>,
      %cst_134 = arith.constant 0.000000e+00 : f32
      %170 = vector.broadcast %cst_134 : f32 to vector<8x1xf32>
      %c0_135 = arith.constant 0 : index
      %c0_136 = arith.constant 0 : index
      %171 = vector.load %arg24[%c0_135, %c0_136] : memref<8x1xf32, #tpu.memory_space<vmem>>, vector<8x1xf32>
      tpu.vector_store %arg24[%c0_135, %c0_136], %170 {strides = array<i32>} : memref<8x1xf32, #tpu.memory_space<vmem>>, vector<8x1xf32>,
    } else {
    }
    %c0 = arith.constant 0 : index
    %c0_1 = arith.constant 0 : index
    %5 = vector.load %arg17[%c0, %c0_1] : memref<8x32xbf16, #tpu.memory_space<vmem>>, vector<8x32xbf16>
    %c0_2 = arith.constant 0 : index
    %c0_3 = arith.constant 0 : index
    %6 = vector.load %arg7[%c0_2, %c0_3] : memref<32x512xbf16, #tpu.memory_space<vmem>>, vector<32x512xbf16>
    %cst = arith.constant dense<0.000000e+00> : vector<8x512xf32>
    %7 = tpu.matmul %5, %6, %cst {dimension_numbers = #tpu.dot_dimension_numbers<[1], [0], [0], [1], [0, 0, 1, 1], [], []>} : vector<8x32xbf16>, vector<32x512xbf16>, vector<8x512xf32> -> vector<8x512xf32>
    %8 = arith.index_cast %1 : i32 to index
    %c0_4 = arith.constant 0 : index
    %9 = vector.load %arg8[%8, %c0_4] : memref<4x512xf32, #tpu.memory_space<vmem>>, vector<1x512xf32>
    %10 = vector.broadcast %9 : vector<1x512xf32> to vector<8x512xf32>
    %11 = arith.addf %7, %10 : vector<8x512xf32>
    %12 = vector.extract_strided_slice %11 {offsets = [0, 0], sizes = [8, 256], strides = [1, 1]} : vector<8x512xf32> to vector<8x256xf32>
    %13 = vector.extract_strided_slice %11 {offsets = [0, 256], sizes = [8, 256], strides = [1, 1]} : vector<8x512xf32> to vector<8x256xf32>
    %14 = tpu.iota {dimensions = array<i32: 1>} : vector<8x256xi32>
    %c256_i32 = arith.constant 256 : i32
    %15 = arith.muli %1, %c256_i32 : i32
    %16 = vector.broadcast %15 : i32 to vector<8x256xi32>
    %17 = arith.addi %14, %16 : vector<8x256xi32>
    %c0_5 = arith.constant 0 : index
    %c0_6 = arith.constant 0 : index
    %18 = vector.load %arg19[%c0_5, %c0_6] : memref<8x1xf32, #tpu.memory_space<vmem>>, vector<8x1xf32>
    %cst_7 = arith.constant dense<0xFF800000> : vector<8xf32>
    %19 = vector.multi_reduction <maximumf>, %12, %cst_7 [1] : vector<8x256xf32> to vector<8xf32>
    %20 = vector.shape_cast %19 : vector<8xf32> to vector<8x1xf32>
    %21 = arith.maximumf %18, %20 : vector<8x1xf32>
    %c0_8 = arith.constant 0 : index
    %c0_9 = arith.constant 0 : index
    %22 = vector.load %arg20[%c0_8, %c0_9] : memref<8x1xf32, #tpu.memory_space<vmem>>, vector<8x1xf32>
    %c0_10 = arith.constant 0 : index
    %c0_11 = arith.constant 0 : index
    %23 = vector.load %arg19[%c0_10, %c0_11] : memref<8x1xf32, #tpu.memory_space<vmem>>, vector<8x1xf32>
    %24 = arith.subf %23, %21 : vector<8x1xf32>
    %25 = math.exp %24 : vector<8x1xf32>
    %26 = arith.mulf %22, %25 : vector<8x1xf32>
    %27 = vector.broadcast %21 : vector<8x1xf32> to vector<8x256xf32>
    %28 = arith.subf %12, %27 : vector<8x256xf32>
    %29 = math.exp %28 : vector<8x256xf32>
    %cst_12 = arith.constant dense<0.000000e+00> : vector<8xf32>
    %30 = vector.multi_reduction <add>, %29, %cst_12 [1] : vector<8x256xf32> to vector<8xf32>
    %31 = vector.shape_cast %30 : vector<8xf32> to vector<8x1xf32>
    %32 = arith.addf %26, %31 : vector<8x1xf32>
    %c0_13 = arith.constant 0 : index
    %c0_14 = arith.constant 0 : index
    %33 = vector.load %arg20[%c0_13, %c0_14] : memref<8x1xf32, #tpu.memory_space<vmem>>, vector<8x1xf32>
    tpu.vector_store %arg20[%c0_13, %c0_14], %32 {strides = array<i32>} : memref<8x1xf32, #tpu.memory_space<vmem>>, vector<8x1xf32>,
    %c0_15 = arith.constant 0 : index
    %c0_16 = arith.constant 0 : index
    %34 = vector.load %arg19[%c0_15, %c0_16] : memref<8x1xf32, #tpu.memory_space<vmem>>, vector<8x1xf32>
    tpu.vector_store %arg19[%c0_15, %c0_16], %21 {strides = array<i32>} : memref<8x1xf32, #tpu.memory_space<vmem>>, vector<8x1xf32>,
    %c0_17 = arith.constant 0 : index
    %c0_18 = arith.constant 0 : index
    %35 = vector.load %arg21[%c0_17, %c0_18] : memref<8x1xf32, #tpu.memory_space<vmem>>, vector<8x1xf32>
    %c0_19 = arith.constant 0 : index
    %c0_20 = arith.constant 0 : index
    %36 = vector.load %arg3[%c0_19, %c0_20] : memref<8x1xi32, #tpu.memory_space<vmem>>, vector<8x1xi32>
    %37 = vector.broadcast %36 : vector<8x1xi32> to vector<8x256xi32>
    %38 = arith.cmpi eq, %17, %37 : vector<8x256xi32>
    %cst_21 = arith.constant 0.000000e+00 : f32
    %39 = vector.broadcast %cst_21 : f32 to vector<8x256xf32>
    %40 = arith.select %38, %12, %39 : vector<8x256xi1>, vector<8x256xf32>
    %cst_22 = arith.constant dense<0.000000e+00> : vector<8xf32>
    %41 = vector.multi_reduction <add>, %40, %cst_22 [1] : vector<8x256xf32> to vector<8xf32>
    %42 = vector.shape_cast %41 : vector<8xf32> to vector<8x1xf32>
    %43 = arith.addf %35, %42 : vector<8x1xf32>
    %c0_23 = arith.constant 0 : index
    %c0_24 = arith.constant 0 : index
    %44 = vector.load %arg21[%c0_23, %c0_24] : memref<8x1xf32, #tpu.memory_space<vmem>>, vector<8x1xf32>
    tpu.vector_store %arg21[%c0_23, %c0_24], %43 {strides = array<i32>} : memref<8x1xf32, #tpu.memory_space<vmem>>, vector<8x1xf32>,
    %c0_25 = arith.constant 0 : index
    %c0_26 = arith.constant 0 : index
    %45 = vector.load %arg22[%c0_25, %c0_26] : memref<8x1xf32, #tpu.memory_space<vmem>>, vector<8x1xf32>
    %cst_27 = arith.constant dense<0xFF800000> : vector<8xf32>
    %46 = vector.multi_reduction <maximumf>, %13, %cst_27 [1] : vector<8x256xf32> to vector<8xf32>
    %47 = vector.shape_cast %46 : vector<8xf32> to vector<8x1xf32>
    %48 = arith.maximumf %45, %47 : vector<8x1xf32>
    %c0_28 = arith.constant 0 : index
    %c0_29 = arith.constant 0 : index
    %49 = vector.load %arg23[%c0_28, %c0_29] : memref<8x1xf32, #tpu.memory_space<vmem>>, vector<8x1xf32>
    %c0_30 = arith.constant 0 : index
    %c0_31 = arith.constant 0 : index
    %50 = vector.load %arg22[%c0_30, %c0_31] : memref<8x1xf32, #tpu.memory_space<vmem>>, vector<8x1xf32>
    %51 = arith.subf %50, %48 : vector<8x1xf32>
    %52 = math.exp %51 : vector<8x1xf32>
    %53 = arith.mulf %49, %52 : vector<8x1xf32>
    %54 = vector.broadcast %48 : vector<8x1xf32> to vector<8x256xf32>
    %55 = arith.subf %13, %54 : vector<8x256xf32>
    %56 = math.exp %55 : vector<8x256xf32>
    %cst_32 = arith.constant dense<0.000000e+00> : vector<8xf32>
    %57 = vector.multi_reduction <add>, %56, %cst_32 [1] : vector<8x256xf32> to vector<8xf32>
    %58 = vector.shape_cast %57 : vector<8xf32> to vector<8x1xf32>
    %59 = arith.addf %53, %58 : vector<8x1xf32>
    %c0_33 = arith.constant 0 : index
    %c0_34 = arith.constant 0 : index
    %60 = vector.load %arg23[%c0_33, %c0_34] : memref<8x1xf32, #tpu.memory_space<vmem>>, vector<8x1xf32>
    tpu.vector_store %arg23[%c0_33, %c0_34], %59 {strides = array<i32>} : memref<8x1xf32, #tpu.memory_space<vmem>>, vector<8x1xf32>,
    %c0_35 = arith.constant 0 : index
    %c0_36 = arith.constant 0 : index
    %61 = vector.load %arg22[%c0_35, %c0_36] : memref<8x1xf32, #tpu.memory_space<vmem>>, vector<8x1xf32>
    tpu.vector_store %arg22[%c0_35, %c0_36], %48 {strides = array<i32>} : memref<8x1xf32, #tpu.memory_space<vmem>>, vector<8x1xf32>,
    %c0_37 = arith.constant 0 : index
    %c0_38 = arith.constant 0 : index
    %62 = vector.load %arg24[%c0_37, %c0_38] : memref<8x1xf32, #tpu.memory_space<vmem>>, vector<8x1xf32>
    %c0_39 = arith.constant 0 : index
    %c0_40 = arith.constant 0 : index
    %63 = vector.load %arg4[%c0_39, %c0_40] : memref<8x1xi32, #tpu.memory_space<vmem>>, vector<8x1xi32>
    %64 = vector.broadcast %63 : vector<8x1xi32> to vector<8x256xi32>
    %65 = arith.cmpi eq, %17, %64 : vector<8x256xi32>
    %cst_41 = arith.constant 0.000000e+00 : f32
    %66 = vector.broadcast %cst_41 : f32 to vector<8x256xf32>
    %67 = arith.select %65, %13, %66 : vector<8x256xi1>, vector<8x256xf32>
    %cst_42 = arith.constant dense<0.000000e+00> : vector<8xf32>
    %68 = vector.multi_reduction <add>, %67, %cst_42 [1] : vector<8x256xf32> to vector<8xf32>
    %69 = vector.shape_cast %68 : vector<8xf32> to vector<8x1xf32>
    %70 = arith.addf %62, %69 : vector<8x1xf32>
    %c0_43 = arith.constant 0 : index
    %c0_44 = arith.constant 0 : index
    %71 = vector.load %arg24[%c0_43, %c0_44] : memref<8x1xf32, #tpu.memory_space<vmem>>, vector<8x1xf32>
    tpu.vector_store %arg24[%c0_43, %c0_44], %70 {strides = array<i32>} : memref<8x1xf32, #tpu.memory_space<vmem>>, vector<8x1xf32>,
    %c1_i32 = arith.constant 1 : i32
    %72 = arith.cmpi eq, %arg1, %c1_i32 : i32
    %73 = arith.extui %72 : i1 to i32
    %c0_i32_45 = arith.constant 0 : i32
    %74 = arith.cmpi ne, %73, %c0_i32_45 : i32
    scf.if %74 {
      %c0_46 = arith.constant 0 : index
      %c0_47 = arith.constant 0 : index
      %75 = vector.load %arg19[%c0_46, %c0_47] : memref<8x1xf32, #tpu.memory_space<vmem>>, vector<8x1xf32>
      %c0_48 = arith.constant 0 : index
      %c0_49 = arith.constant 0 : index
      %76 = vector.load %arg20[%c0_48, %c0_49] : memref<8x1xf32, #tpu.memory_space<vmem>>, vector<8x1xf32>
      %77 = math.log %76 : vector<8x1xf32>
      %78 = arith.addf %75, %77 : vector<8x1xf32>
      %c0_50 = arith.constant 0 : index
      %c0_51 = arith.constant 0 : index
      %c0_52 = arith.constant 0 : index
      %79 = vector.load %arg11[%c0_50, %c0_51, %c0_52] : memref<1x8x1xf32, #tpu.memory_space<vmem>>, vector<1x8x1xf32>
      %80 = vector.shape_cast %79 : vector<1x8x1xf32> to vector<8x1xf32>
      %81 = vector.shape_cast %78 : vector<8x1xf32> to vector<1x8x1xf32>
      tpu.vector_store %arg11[%c0_50, %c0_51, %c0_52], %81 {strides = array<i32>} : memref<1x8x1xf32, #tpu.memory_space<vmem>>, vector<1x8x1xf32>,
      %c0_53 = arith.constant 0 : index
      %c0_54 = arith.constant 0 : index
      %82 = vector.load %arg21[%c0_53, %c0_54] : memref<8x1xf32, #tpu.memory_space<vmem>>, vector<8x1xf32>
      %c0_55 = arith.constant 0 : index
      %c0_56 = arith.constant 0 : index
      %c0_57 = arith.constant 0 : index
      %83 = vector.load %arg12[%c0_55, %c0_56, %c0_57] : memref<1x8x1xf32, #tpu.memory_space<vmem>>, vector<1x8x1xf32>
      %84 = vector.shape_cast %83 : vector<1x8x1xf32> to vector<8x1xf32>
      %85 = vector.shape_cast %82 : vector<8x1xf32> to vector<1x8x1xf32>
      tpu.vector_store %arg12[%c0_55, %c0_56, %c0_57], %85 {strides = array<i32>} : memref<1x8x1xf32, #tpu.memory_space<vmem>>, vector<1x8x1xf32>,
      %c0_58 = arith.constant 0 : index
      %c0_59 = arith.constant 0 : index
      %86 = vector.load %arg22[%c0_58, %c0_59] : memref<8x1xf32, #tpu.memory_space<vmem>>, vector<8x1xf32>
      %c0_60 = arith.constant 0 : index
      %c0_61 = arith.constant 0 : index
      %87 = vector.load %arg23[%c0_60, %c0_61] : memref<8x1xf32, #tpu.memory_space<vmem>>, vector<8x1xf32>
      %88 = math.log %87 : vector<8x1xf32>
      %89 = arith.addf %86, %88 : vector<8x1xf32>
      %c0_62 = arith.constant 0 : index
      %c0_63 = arith.constant 0 : index
      %c0_64 = arith.constant 0 : index
      %90 = vector.load %arg13[%c0_62, %c0_63, %c0_64] : memref<1x8x1xf32, #tpu.memory_space<vmem>>, vector<1x8x1xf32>
      %91 = vector.shape_cast %90 : vector<1x8x1xf32> to vector<8x1xf32>
      %92 = vector.shape_cast %89 : vector<8x1xf32> to vector<1x8x1xf32>
      tpu.vector_store %arg13[%c0_62, %c0_63, %c0_64], %92 {strides = array<i32>} : memref<1x8x1xf32, #tpu.memory_space<vmem>>, vector<1x8x1xf32>,
      %c0_65 = arith.constant 0 : index
      %c0_66 = arith.constant 0 : index
      %93 = vector.load %arg24[%c0_65, %c0_66] : memref<8x1xf32, #tpu.memory_space<vmem>>, vector<8x1xf32>
      %c0_67 = arith.constant 0 : index
      %c0_68 = arith.constant 0 : index
      %c0_69 = arith.constant 0 : index
      %94 = vector.load %arg14[%c0_67, %c0_68, %c0_69] : memref<1x8x1xf32, #tpu.memory_space<vmem>>, vector<1x8x1xf32>
      %95 = vector.shape_cast %94 : vector<1x8x1xf32> to vector<8x1xf32>
      %96 = vector.shape_cast %93 : vector<8x1xf32> to vector<1x8x1xf32>
      tpu.vector_store %arg14[%c0_67, %c0_68, %c0_69], %96 {strides = array<i32>} : memref<1x8x1xf32, #tpu.memory_space<vmem>>, vector<1x8x1xf32>,
      %c0_70 = arith.constant 0 : index
      %c0_71 = arith.constant 0 : index
      %97 = vector.load %arg9[%c0_70, %c0_71] : memref<32x128xbf16, #tpu.memory_space<vmem>>, vector<32x128xbf16>
      %cst_72 = arith.constant dense<0.000000e+00> : vector<8x128xf32>
      %98 = tpu.matmul %5, %97, %cst_72 {dimension_numbers = #tpu.dot_dimension_numbers<[1], [0], [0], [1], [0, 0, 1, 1], [], []>} : vector<8x32xbf16>, vector<32x128xbf16>, vector<8x128xf32> -> vector<8x128xf32>
      %c0_73 = arith.constant 0 : index
      %c0_74 = arith.constant 0 : index
      %99 = vector.load %arg10[%c0_73, %c0_74] : memref<1x128xf32, #tpu.memory_space<vmem>>, vector<1x128xf32>
      %100 = vector.broadcast %99 : vector<1x128xf32> to vector<8x128xf32>
      %101 = arith.addf %98, %100 : vector<8x128xf32>
      %102 = tpu.iota {dimensions = array<i32: 1>} : vector<8x128xi32>
      %cst_75 = arith.constant dense<0xFF800000> : vector<8xf32>
      %103 = vector.multi_reduction <maximumf>, %101, %cst_75 [1] : vector<8x128xf32> to vector<8xf32>
      %104 = vector.shape_cast %103 : vector<8xf32> to vector<8x1xf32>
      %105 = vector.broadcast %104 : vector<8x1xf32> to vector<8x128xf32>
      %106 = arith.subf %101, %105 : vector<8x128xf32>
      %107 = math.exp %106 : vector<8x128xf32>
      %cst_76 = arith.constant dense<0.000000e+00> : vector<8xf32>
      %108 = vector.multi_reduction <add>, %107, %cst_76 [1] : vector<8x128xf32> to vector<8xf32>
      %109 = vector.shape_cast %108 : vector<8xf32> to vector<8x1xf32>
      %110 = math.log %109 : vector<8x1xf32>
      %111 = arith.addf %104, %110 : vector<8x1xf32>
      %c0_77 = arith.constant 0 : index
      %c0_78 = arith.constant 0 : index
      %112 = vector.load %arg5[%c0_77, %c0_78] : memref<8x1xi32, #tpu.memory_space<vmem>>, vector<8x1xi32>
      %113 = vector.broadcast %112 : vector<8x1xi32> to vector<8x128xi32>
      %114 = arith.cmpi eq, %102, %113 : vector<8x128xi32>
      %cst_79 = arith.constant 0.000000e+00 : f32
      %115 = vector.broadcast %cst_79 : f32 to vector<8x128xf32>
      %116 = arith.select %114, %101, %115 : vector<8x128xi1>, vector<8x128xf32>
      %cst_80 = arith.constant dense<0.000000e+00> : vector<8xf32>
      %117 = vector.multi_reduction <add>, %116, %cst_80 [1] : vector<8x128xf32> to vector<8xf32>
      %118 = vector.shape_cast %117 : vector<8xf32> to vector<8x1xf32>
      %119 = arith.subf %111, %118 : vector<8x1xf32>
      %c0_81 = arith.constant 0 : index
      %c0_82 = arith.constant 0 : index
      %c0_83 = arith.constant 0 : index
      %120 = vector.load %arg15[%c0_81, %c0_82, %c0_83] : memref<1x8x1xf32, #tpu.memory_space<vmem>>, vector<1x8x1xf32>
      %121 = vector.shape_cast %120 : vector<1x8x1xf32> to vector<8x1xf32>
      %122 = vector.shape_cast %119 : vector<8x1xf32> to vector<1x8x1xf32>
      tpu.vector_store %arg15[%c0_81, %c0_82, %c0_83], %122 {strides = array<i32>} : memref<1x8x1xf32, #tpu.memory_space<vmem>>, vector<1x8x1xf32>,
    } else {
    }
    return
  }
  func.func @transform_0(%arg0: i32, %arg1: i32, %arg2: memref<8xi32, #tpu.memory_space<smem>>) -> (i32, i32) {
    %c0_i32 = arith.constant 0 : i32
    %c0_i32_0 = arith.constant 0 : i32
    %c0_i32_1 = arith.constant 0 : i32
    return %c0_i32, %c0_i32_0 : i32, i32
  }
  func.func @transform_1(%arg0: i32, %arg1: i32, %arg2: memref<8xi32, #tpu.memory_space<smem>>) -> (i32, i32) {
    %c0_i32 = arith.constant 0 : i32
    %c0_i32_0 = arith.constant 0 : i32
    %c0_i32_1 = arith.constant 0 : i32
    return %c0_i32, %c0_i32_0 : i32, i32
  }
  func.func @transform_2(%arg0: i32, %arg1: i32, %arg2: memref<8xi32, #tpu.memory_space<smem>>) -> (i32, i32) {
    %c0_i32 = arith.constant 0 : i32
    %c0_i32_0 = arith.constant 0 : i32
    %c0_i32_1 = arith.constant 0 : i32
    return %c0_i32, %c0_i32_0 : i32, i32
  }
  func.func @transform_4(%arg0: i32, %arg1: i32, %arg2: memref<8xi32, #tpu.memory_space<smem>>) -> (i32, i32) {
    %c2_i32 = arith.constant 2 : i32
    %0 = arith.muli %arg0, %c2_i32 : i32
    %1 = arith.addi %0, %arg1 : i32
    %c0_i32 = arith.constant 0 : i32
    %c0_i32_0 = arith.constant 0 : i32
    return %c0_i32, %1 : i32, i32
  }
  func.func @transform_5(%arg0: i32, %arg1: i32, %arg2: memref<8xi32, #tpu.memory_space<smem>>) -> (i32, i32) {
    %c0_i32 = arith.constant 0 : i32
    %c0_i32_0 = arith.constant 0 : i32
    %c0_i32_1 = arith.constant 0 : i32
    return %c0_i32, %c0_i32_0 : i32, i32
  }
  func.func @transform_6(%arg0: i32, %arg1: i32, %arg2: memref<8xi32, #tpu.memory_space<smem>>) -> (i32, i32) {
    %c0_i32 = arith.constant 0 : i32
    %c0_i32_0 = arith.constant 0 : i32
    %c0_i32_1 = arith.constant 0 : i32
    return %c0_i32, %c0_i32_0 : i32, i32
  }
  func.func @transform_7(%arg0: i32, %arg1: i32, %arg2: memref<8xi32, #tpu.memory_space<smem>>) -> (i32, i32) {
    %c0_i32 = arith.constant 0 : i32
    %c0_i32_0 = arith.constant 0 : i32
    %c0_i32_1 = arith.constant 0 : i32
    return %c0_i32, %c0_i32_0 : i32, i32
  }
  func.func @transform_8(%arg0: i32, %arg1: i32, %arg2: memref<8xi32, #tpu.memory_space<smem>>) -> (i32, i32, i32) {
    %c0_i32 = arith.constant 0 : i32
    %c0_i32_0 = arith.constant 0 : i32
    %c0_i32_1 = arith.constant 0 : i32
    return %arg0, %c0_i32, %c0_i32_0 : i32, i32, i32
  }
  func.func @transform_9(%arg0: i32, %arg1: i32, %arg2: memref<8xi32, #tpu.memory_space<smem>>) -> (i32, i32, i32) {
    %c0_i32 = arith.constant 0 : i32
    %c0_i32_0 = arith.constant 0 : i32
    %c0_i32_1 = arith.constant 0 : i32
    return %arg0, %c0_i32, %c0_i32_0 : i32, i32, i32
  }
  func.func @transform_10(%arg0: i32, %arg1: i32, %arg2: memref<8xi32, #tpu.memory_space<smem>>) -> (i32, i32, i32) {
    %c0_i32 = arith.constant 0 : i32
    %c0_i32_0 = arith.constant 0 : i32
    %c0_i32_1 = arith.constant 0 : i32
    return %arg0, %c0_i32, %c0_i32_0 : i32, i32, i32
  }
  func.func @transform_11(%arg0: i32, %arg1: i32, %arg2: memref<8xi32, #tpu.memory_space<smem>>) -> (i32, i32, i32) {
    %c0_i32 = arith.constant 0 : i32
    %c0_i32_0 = arith.constant 0 : i32
    %c0_i32_1 = arith.constant 0 : i32
    return %arg0, %c0_i32, %c0_i32_0 : i32, i32, i32
  }
  func.func @transform_12(%arg0: i32, %arg1: i32, %arg2: memref<8xi32, #tpu.memory_space<smem>>) -> (i32, i32, i32) {
    %c0_i32 = arith.constant 0 : i32
    %c0_i32_0 = arith.constant 0 : i32
    %c0_i32_1 = arith.constant 0 : i32
    return %arg0, %c0_i32, %c0_i32_0 : i32, i32, i32
  }
}

</mosaic_0001>

<llo_original>
// kernel: go_embedder_forward.1
$region0: #{go_embedder_forward.1}
  #allocation0 [shape = 'u32[]', space=smem, size = 0x4, offset = 0x4, fixed_abs, tag = 'smem constant byte address 0x4 - core index']
  #allocation1 [shape = 'u32[144,128]{1,0:T(1,128)}', space=vmem, size = 0x12000, scoped, tag = 'internal scratch']
  #allocation2 [shape = 'f32[8,32]{1,0:T(8,128)}', space=vmem, size = 0x1000, scoped, tag = 'scratch operand']
  #allocation3 [shape = 'bf16[8,32]{1,0:T(8,128)(2,1)}', space=vmem, size = 0x800, scoped, tag = 'scratch operand']
  #allocation4 [shape = 's32[8]{0}', space=sflag, size = 0x20, scoped, tag = 'scratch operand']
  #allocation5 [shape = 'f32[8,1]{1,0:T(8,128)}', space=vmem, size = 0x1000, scoped, tag = 'scratch operand']
  #allocation6 [shape = 'f32[8,1]{1,0:T(8,128)}', space=vmem, size = 0x1000, scoped, tag = 'scratch operand']
  #allocation7 [shape = 'f32[8,1]{1,0:T(8,128)}', space=vmem, size = 0x1000, scoped, tag = 'scratch operand']
  #allocation8 [shape = 'f32[8,1]{1,0:T(8,128)}', space=vmem, size = 0x1000, scoped, tag = 'scratch operand']
  #allocation9 [shape = 'f32[8,1]{1,0:T(8,128)}', space=vmem, size = 0x1000, scoped, tag = 'scratch operand']
  #allocation10 [shape = 'f32[8,1]{1,0:T(8,128)}', space=vmem, size = 0x1000, scoped, tag = 'scratch operand']
  #allocation11 [shape = 's32[1]{0}', space=sflag, size = 0x4, scoped, tag = 'scoped memory for go_embedder_forward.1']
  #allocation12 [shape = 'u8[512]{0}', space=smem, size = 0x200, scoped, tag = 'prefetched SMEM operand 0']
  #allocation14 [shape = 's32[]', space=sflag, size = 0x4, offset = 0, fixed_abs, tag = 'sflag constant byte address 0x0 - dummy sync flag']
  #allocation15 [shape = 's32[]', space=sflag, size = 0x4, offset = 0, fixed_abs, tag = 'sflag constant byte address 0x0 - dummy sync flag']
  #allocation16 [shape = 'u32[]', space=smem, size = 0x4, offset = 0x44, fixed_abs, tag = 'smem constant byte address 0x44 - assertion arg 0']
  #allocation17 [shape = 'u32[]', space=smem, size = 0x4, offset = 0x48, fixed_abs, tag = 'smem constant byte address 0x48 - assertion arg 1']
  #allocation18 [shape = 's32[]', space=sflag, size = 0x4, offset = 0, fixed_abs, tag = 'sflag constant byte address 0x0 - dummy sync flag']
  #allocation19 [shape = 's32[]', space=sflag, size = 0x4, offset = 0, fixed_abs, tag = 'sflag constant byte address 0x0 - dummy sync flag']
  #allocation20 [shape = 's32[]', space=sflag, size = 0x4, offset = 0, fixed_abs, tag = 'sflag constant byte address 0x0 - dummy sync flag']
  #allocation21 [shape = 's32[]', space=sflag, size = 0x4, offset = 0, fixed_abs, tag = 'sflag constant byte address 0x0 - dummy sync flag']
  #allocation22 [shape = 's32[]', space=sflag, size = 0x4, offset = 0, fixed_abs, tag = 'sflag constant byte address 0x0 - dummy sync flag']
  #allocation23 [shape = 's32[]', space=sflag, size = 0x4, offset = 0, fixed_abs, tag = 'sflag constant byte address 0x0 - dummy sync flag']
  #allocation24 [shape = 's32[]', space=sflag, size = 0x4, offset = 0, fixed_abs, tag = 'sflag constant byte address 0x0 - dummy sync flag']
  #allocation25 [shape = 's32[]', space=sflag, size = 0x4, offset = 0, fixed_abs, tag = 'sflag constant byte address 0x0 - dummy sync flag']
  #allocation26 [shape = 's32[]', space=sflag, size = 0x4, offset = 0, fixed_abs, tag = 'sflag constant byte address 0x0 - dummy sync flag']
  #allocation27 [shape = 's32[]', space=sflag, size = 0x4, offset = 0, fixed_abs, tag = 'sflag constant byte address 0x0 - dummy sync flag']
  #allocation28 [shape = 's32[]', space=sflag, size = 0x4, offset = 0, fixed_abs, tag = 'sflag constant byte address 0x0 - dummy sync flag']
  #allocation29 [shape = 's32[]', space=sflag, size = 0x4, offset = 0, fixed_abs, tag = 'sflag constant byte address 0x0 - dummy sync flag']
  #allocation30 [shape = 's32[]', space=sflag, size = 0x4, offset = 0, fixed_abs, tag = 'sflag constant byte address 0x0 - dummy sync flag']
  #allocation31 [shape = 's32[]', space=sflag, size = 0x4, offset = 0, fixed_abs, tag = 'sflag constant byte address 0x0 - dummy sync flag']
  %s0 = inlined_call_operand.vmem [shape: s32[8], index: 0, kind: input, shape index: {}]
  %s1 = inlined_call_operand.vmem [shape: s32[8,1], index: 1, kind: input, shape index: {}]
  %s2 = inlined_call_operand.vmem [shape: s32[8,1], index: 2, kind: input, shape index: {}]
  %s3 = inlined_call_operand.vmem [shape: s32[8,1], index: 3, kind: input, shape index: {}]
  %s4 = inlined_call_operand.hbm [shape: f32[1000,32], index: 4, kind: input, shape index: {}]
  %s5 = inlined_call_operand.vmem [shape: bf16[32,2048], index: 5, kind: input, shape index: {}]
  %s6 = inlined_call_operand.vmem [shape: f32[4,512], index: 6, kind: input, shape index: {}]
  %s7 = inlined_call_operand.vmem [shape: bf16[32,128], index: 7, kind: input, shape index: {}]
  %s8 = inlined_call_operand.vmem [shape: f32[1,128], index: 8, kind: input, shape index: {}]
  %s9 = inlined_call_operand.vmem [shape: f32[2,8,1], index: 9, kind: output, shape index: {0}]
  %s10 = inlined_call_operand.vmem [shape: f32[2,8,1], index: 10, kind: output, shape index: {1}]
  %s11 = inlined_call_operand.vmem [shape: f32[2,8,1], index: 11, kind: output, shape index: {2}]
  %s12 = inlined_call_operand.vmem [shape: f32[2,8,1], index: 12, kind: output, shape index: {3}]
  %s13 = inlined_call_operand.vmem [shape: f32[2,8,1], index: 13, kind: output, shape index: {4}]
  %14 = xla_tuple %s9, %s10, %s11, %s12, %s13
  %s15 = sld [smem:[#allocation0]]
  $region156: #{go_embedder_forward.1} parent=0
    _
  %s17 = ssub.s32 1, %s15
  %s18 = scalar_select 0, %s17, %s15
  %s19 = sshll.u32 %s0, 4
  %s20 = int_to_ptr.vmem [resolvable:$true] %s19
  %22 = dma.vmem_to_smem %s20, 16, [#allocation12], [#allocation11]
  %23 = dma.done [#allocation11], 16
  %24 = sfence
  $region1: #{go_embedder_forward.1} parent=0
    #allocation13 [shape = 'u8[65536]{0}', space=vmem, size = 0x10000, scoped, tag = 'input window, operand 5']
    loop: start=0, step=1, limit=6
    $region2: #{go_embedder_forward.1} parent=1 // loop_pre_header
      _
    $region3: #{go_embedder_forward.1} parent=1 // loop_header
      %s26 = sphi 0, %s30
      %p27 = scmp.ge.s32.totalorder %s26, 6
      %s33 = sphi 0, %s45
      %s34 = sphi 0, %s41
      %s35 = sphi 0, %s33
      %s36 = sphi 0, %s34
      %s37 = sphi 0, %s35
      %s38 = sphi 0, %s36
      %s46 = sphi 0, %s46
      %s48 = sphi 0, %s46
      %s49 = sphi 0, %s48
      %s63 = sphi 0, %s49
      %s67 = sphi 0, %s67
      %s69 = sphi 0, %s67
      %s70 = sphi 0, %s69
      %s84 = sphi 0, %s70
      %s88 = sphi 0, %s88
      %s90 = sphi 0, %s88
      %s91 = sphi 0, %s90
      %s105 = sphi 0, %s91
      %s115 = sphi 0, %s117
      %s118 = sphi 0, %s115
      %s119 = sphi 0, %s118
      %s135 = sphi 0, %s119
      %s139 = sphi 0, %s139
      %s141 = sphi 0, %s139
      %s142 = sphi 0, %s141
      %s156 = sphi 0, %s142
      %s160 = sphi 0, %s160
      %s162 = sphi 0, %s160
      %s163 = sphi 0, %s162
      %s177 = sphi 0, %s163
      %s181 = sphi 0, %s181
      %s183 = sphi 0, %s181
      %s184 = sphi 0, %s183
      %s198 = sphi 0, %s184
      %s204 = sphi 0, %s206
      %s207 = sphi 0, %s204
      %s208 = sphi 0, %s207
      %s224 = sphi 0, %s208
      %s230 = sphi 0, %s232
      %s233 = sphi 0, %s230
      %s234 = sphi 0, %s233
      %s250 = sphi 0, %s234
      %s256 = sphi 0, %s258
      %s259 = sphi 0, %s256
      %s260 = sphi 0, %s259
      %s276 = sphi 0, %s260
      %s282 = sphi 0, %s284
      %s285 = sphi 0, %s282
      %s286 = sphi 0, %s285
      %s302 = sphi 0, %s286
      %s308 = sphi 0, %s310
      %s311 = sphi 0, %s308
      %s312 = sphi 0, %s311
      %s328 = sphi 0, %s312
    $region4: #{go_embedder_forward.1} parent=1 // loop_header_branch
      %29 = sbr.rel (%p27) target = $region8
    $region5: #{go_embedder_forward.1} parent=1 // loop_body
      %s31 = ssub.s32 %s26, 1
      %s32 = ssub.s32 %s26, 2
      %s39 = sadd.s32 1, %s34
      %p40 = scmp.ge.s32.totalorder %s39, 2
      %s41 = scalar_select %p40, 0, %s39
      %s42 = sadd.s32 1, %s33
      %s43 = scalar_select %p40, %s42, %s33
      %p44 = scmp.ge.s32.totalorder %s43, 2
      %s45 = scalar_select %p44, 0, %s43
      %s47 = sadd.s32 %s46, 1
      %p50 = scmp.eq.s32.totalorder %s26, 3
      %p51 = scmp.ne.s32.totalorder %s46, %s48
      %p52 = scmp.eq.s32.totalorder %s26, 0
      %p53 = por %p51, %p52
      %p54 = scmp.ne.s32.totalorder %s46, %s48
      %p55 = scmp.eq.s32.totalorder %s31, 3
      %p56 = por %p54, %p55
      %p57 = scmp.ne.s32.totalorder %s48, %s49
      %p58 = scmp.eq.s32.totalorder %s31, 0
      %p59 = por %p57, %p58
      %p60 = scmp.ne.s32.totalorder %s48, %s49
      %p61 = scmp.eq.s32.totalorder %s32, 3
      %p62 = por %p60, %p61
      %p64 = scmp.ne.s32.totalorder %s49, %s63
      %p65 = scmp.eq.s32.totalorder %s32, 0
      %p66 = por %p64, %p65
      %s68 = sadd.s32 %s67, 1
      %p71 = scmp.eq.s32.totalorder %s26, 3
      %p72 = scmp.ne.s32.totalorder %s67, %s69
      %p73 = scmp.eq.s32.totalorder %s26, 0
      %p74 = por %p72, %p73
      %p75 = scmp.ne.s32.totalorder %s67, %s69
      %p76 = scmp.eq.s32.totalorder %s31, 3
      %p77 = por %p75, %p76
      %p78 = scmp.ne.s32.totalorder %s69, %s70
      %p79 = scmp.eq.s32.totalorder %s31, 0
      %p80 = por %p78, %p79
      %p81 = scmp.ne.s32.totalorder %s69, %s70
      %p82 = scmp.eq.s32.totalorder %s32, 3
      %p83 = por %p81, %p82
      %p85 = scmp.ne.s32.totalorder %s70, %s84
      %p86 = scmp.eq.s32.totalorder %s32, 0
      %p87 = por %p85, %p86
      %s89 = sadd.s32 %s88, 1
      %p92 = scmp.eq.s32.totalorder %s26, 3
      %p93 = scmp.ne.s32.totalorder %s88, %s90
      %p94 = scmp.eq.s32.totalorder %s26, 0
      %p95 = por %p93, %p94
      %p96 = scmp.ne.s32.totalorder %s88, %s90
      %p97 = scmp.eq.s32.totalorder %s31, 3
      %p98 = por %p96, %p97
      %p99 = scmp.ne.s32.totalorder %s90, %s91
      %p100 = scmp.eq.s32.totalorder %s31, 0
      %p101 = por %p99, %p100
      %p102 = scmp.ne.s32.totalorder %s90, %s91
      %p103 = scmp.eq.s32.totalorder %s32, 3
      %p104 = por %p102, %p103
      %p106 = scmp.ne.s32.totalorder %s91, %s105
      %p107 = scmp.eq.s32.totalorder %s32, 0
      %p108 = por %p106, %p107
      %s109 = smul.u32 %s33, 2
      %s110 = sadd.s32 %s109, %s34
      %s111 = smul.u32 %s45, 2
      %s112 = sadd.s32 %s111, %s41
      %s113 = ssub.s32 %s110, %s112
      %p114 = scmp.eq.s32.totalorder %s113, 0
      %s116 = sadd.s32 %s115, 1
      %s117 = scalar_select %p114, %s115, %s116
      %p120 = pneg %p114
      %p121 = scmp.eq.s32.totalorder %s26, 3
      %p122 = por %p120, %p121
      %p123 = scmp.ne.s32.totalorder %s115, %s118
      %p124 = scmp.eq.s32.totalorder %s26, 0
      %p125 = por %p123, %p124
      %p126 = scmp.ne.s32.totalorder %s115, %s118
      %p127 = scmp.eq.s32.totalorder %s31, 3
      %p128 = por %p126, %p127
      %p129 = scmp.ne.s32.totalorder %s118, %s119
      %p130 = scmp.eq.s32.totalorder %s31, 0
      %p131 = por %p129, %p130
      %p132 = scmp.ne.s32.totalorder %s118, %s119
      %p133 = scmp.eq.s32.totalorder %s32, 3
      %p134 = por %p132, %p133
      %p136 = scmp.ne.s32.totalorder %s119, %s135
      %p137 = scmp.eq.s32.totalorder %s32, 0
      %p138 = por %p136, %p137
      %s140 = sadd.s32 %s139, 1
      %p143 = scmp.eq.s32.totalorder %s26, 3
      %p144 = scmp.ne.s32.totalorder %s139, %s141
      %p145 = scmp.eq.s32.totalorder %s26, 0
      %p146 = por %p144, %p145
      %p147 = scmp.ne.s32.totalorder %s139, %s141
      %p148 = scmp.eq.s32.totalorder %s31, 3
      %p149 = por %p147, %p148
      %p150 = scmp.ne.s32.totalorder %s141, %s142
      %p151 = scmp.eq.s32.totalorder %s31, 0
      %p152 = por %p150, %p151
      %p153 = scmp.ne.s32.totalorder %s141, %s142
      %p154 = scmp.eq.s32.totalorder %s32, 3
      %p155 = por %p153, %p154
      %p157 = scmp.ne.s32.totalorder %s142, %s156
      %p158 = scmp.eq.s32.totalorder %s32, 0
      %p159 = por %p157, %p158
      %s161 = sadd.s32 %s160, 1
      %p164 = scmp.eq.s32.totalorder %s26, 3
      %p165 = scmp.ne.s32.totalorder %s160, %s162
      %p166 = scmp.eq.s32.totalorder %s26, 0
      %p167 = por %p165, %p166
      %p168 = scmp.ne.s32.totalorder %s160, %s162
      %p169 = scmp.eq.s32.totalorder %s31, 3
      %p170 = por %p168, %p169
      %p171 = scmp.ne.s32.totalorder %s162, %s163
      %p172 = scmp.eq.s32.totalorder %s31, 0
      %p173 = por %p171, %p172
      %p174 = scmp.ne.s32.totalorder %s162, %s163
      %p175 = scmp.eq.s32.totalorder %s32, 3
      %p176 = por %p174, %p175
      %p178 = scmp.ne.s32.totalorder %s163, %s177
      %p179 = scmp.eq.s32.totalorder %s32, 0
      %p180 = por %p178, %p179
      %s182 = sadd.s32 %s181, 1
      %p185 = scmp.eq.s32.totalorder %s26, 3
      %p186 = scmp.ne.s32.totalorder %s181, %s183
      %p187 = scmp.eq.s32.totalorder %s26, 0
      %p188 = por %p186, %p187
      %p189 = scmp.ne.s32.totalorder %s181, %s183
      %p190 = scmp.eq.s32.totalorder %s31, 3
      %p191 = por %p189, %p190
      %p192 = scmp.ne.s32.totalorder %s183, %s184
      %p193 = scmp.eq.s32.totalorder %s31, 0
      %p194 = por %p192, %p193
      %p195 = scmp.ne.s32.totalorder %s183, %s184
      %p196 = scmp.eq.s32.totalorder %s32, 3
      %p197 = por %p195, %p196
      %p199 = scmp.ne.s32.totalorder %s184, %s198
      %p200 = scmp.eq.s32.totalorder %s32, 0
      %p201 = por %p199, %p200
      %s202 = ssub.s32 %s33, %s45
      %p203 = scmp.eq.s32.totalorder %s202, 0
      %s205 = sadd.s32 %s204, 1
      %s206 = scalar_select %p203, %s204, %s205
      %p209 = pneg %p203
      %p210 = scmp.eq.s32.totalorder %s26, 3
      %p211 = por %p209, %p210
      %p212 = scmp.ne.s32.totalorder %s204, %s207
      %p213 = scmp.eq.s32.totalorder %s26, 0
      %p214 = por %p212, %p213
      %p215 = scmp.ne.s32.totalorder %s204, %s207
      %p216 = scmp.eq.s32.totalorder %s31, 3
      %p217 = por %p215, %p216
      %p218 = scmp.ne.s32.totalorder %s207, %s208
      %p219 = scmp.eq.s32.totalorder %s31, 0
      %p220 = por %p218, %p219
      %p221 = scmp.ne.s32.totalorder %s207, %s208
      %p222 = scmp.eq.s32.totalorder %s32, 3
      %p223 = por %p221, %p222
      %p225 = scmp.ne.s32.totalorder %s208, %s224
      %p226 = scmp.eq.s32.totalorder %s32, 0
      %p227 = por %p225, %p226
      %s228 = ssub.s32 %s33, %s45
      %p229 = scmp.eq.s32.totalorder %s228, 0
      %s231 = sadd.s32 %s230, 1
      %s232 = scalar_select %p229, %s230, %s231
      %p235 = pneg %p229
      %p236 = scmp.eq.s32.totalorder %s26, 3
      %p237 = por %p235, %p236
      %p238 = scmp.ne.s32.totalorder %s230, %s233
      %p239 = scmp.eq.s32.totalorder %s26, 0
      %p240 = por %p238, %p239
      %p241 = scmp.ne.s32.totalorder %s230, %s233
      %p242 = scmp.eq.s32.totalorder %s31, 3
      %p243 = por %p241, %p242
      %p244 = scmp.ne.s32.totalorder %s233, %s234
      %p245 = scmp.eq.s32.totalorder %s31, 0
      %p246 = por %p244, %p245
      %p247 = scmp.ne.s32.totalorder %s233, %s234
      %p248 = scmp.eq.s32.totalorder %s32, 3
      %p249 = por %p247, %p248
      %p251 = scmp.ne.s32.totalorder %s234, %s250
      %p252 = scmp.eq.s32.totalorder %s32, 0
      %p253 = por %p251, %p252
      %s254 = ssub.s32 %s33, %s45
      %p255 = scmp.eq.s32.totalorder %s254, 0
      %s257 = sadd.s32 %s256, 1
      %s258 = scalar_select %p255, %s256, %s257
      %p261 = pneg %p255
      %p262 = scmp.eq.s32.totalorder %s26, 3
      %p263 = por %p261, %p262
      %p264 = scmp.ne.s32.totalorder %s256, %s259
      %p265 = scmp.eq.s32.totalorder %s26, 0
      %p266 = por %p264, %p265
      %p267 = scmp.ne.s32.totalorder %s256, %s259
      %p268 = scmp.eq.s32.totalorder %s31, 3
      %p269 = por %p267, %p268
      %p270 = scmp.ne.s32.totalorder %s259, %s260
      %p271 = scmp.eq.s32.totalorder %s31, 0
      %p272 = por %p270, %p271
      %p273 = scmp.ne.s32.totalorder %s259, %s260
      %p274 = scmp.eq.s32.totalorder %s32, 3
      %p275 = por %p273, %p274
      %p277 = scmp.ne.s32.totalorder %s260, %s276
      %p278 = scmp.eq.s32.totalorder %s32, 0
      %p279 = por %p277, %p278
      %s280 = ssub.s32 %s33, %s45
      %p281 = scmp.eq.s32.totalorder %s280, 0
      %s283 = sadd.s32 %s282, 1
      %s284 = scalar_select %p281, %s282, %s283
      %p287 = pneg %p281
      %p288 = scmp.eq.s32.totalorder %s26, 3
      %p289 = por %p287, %p288
      %p290 = scmp.ne.s32.totalorder %s282, %s285
      %p291 = scmp.eq.s32.totalorder %s26, 0
      %p292 = por %p290, %p291
      %p293 = scmp.ne.s32.totalorder %s282, %s285
      %p294 = scmp.eq.s32.totalorder %s31, 3
      %p295 = por %p293, %p294
      %p296 = scmp.ne.s32.totalorder %s285, %s286
      %p297 = scmp.eq.s32.totalorder %s31, 0
      %p298 = por %p296, %p297
      %p299 = scmp.ne.s32.totalorder %s285, %s286
      %p300 = scmp.eq.s32.totalorder %s32, 3
      %p301 = por %p299, %p300
      %p303 = scmp.ne.s32.totalorder %s286, %s302
      %p304 = scmp.eq.s32.totalorder %s32, 0
      %p305 = por %p303, %p304
      %s306 = ssub.s32 %s33, %s45
      %p307 = scmp.eq.s32.totalorder %s306, 0
      %s309 = sadd.s32 %s308, 1
      %s310 = scalar_select %p307, %s308, %s309
      %p313 = pneg %p307
      %p314 = scmp.eq.s32.totalorder %s26, 3
      %p315 = por %p313, %p314
      %p316 = scmp.ne.s32.totalorder %s308, %s311
      %p317 = scmp.eq.s32.totalorder %s26, 0
      %p318 = por %p316, %p317
      %p319 = scmp.ne.s32.totalorder %s308, %s311
      %p320 = scmp.eq.s32.totalorder %s31, 3
      %p321 = por %p319, %p320
      %p322 = scmp.ne.s32.totalorder %s311, %s312
      %p323 = scmp.eq.s32.totalorder %s31, 0
      %p324 = por %p322, %p323
      %p325 = scmp.ne.s32.totalorder %s311, %s312
      %p326 = scmp.eq.s32.totalorder %s32, 3
      %p327 = por %p325, %p326
      %p329 = scmp.ne.s32.totalorder %s312, %s328
      %p330 = scmp.eq.s32.totalorder %s32, 0
      %p331 = por %p329, %p330
      %p332 = scmp.le.s32.totalorder 1, %s26
      %p333 = scmp.lt.s32.totalorder %s26, 5
      %p334 = pnand %p332, %p333
      %p335 = pneg %p334
      // Predicated region
      $region9: #{go_embedder_forward.1} parent=5 // pred_check
        _
      $region10: #{go_embedder_forward.1} parent=5 // pred_check_branch
        %337 = sbr.rel (%p334) target = $region12
      $region11: #{go_embedder_forward.1} parent=5 // pred_region
        %s338 = ssub.s32 %s26, 1
        // Predicated region
        $region13: #{go_embedder_forward.1} parent=11 // pred_check
          %p339 = pneg %p59
        $region14: #{go_embedder_forward.1} parent=11 // pred_check_branch
          %341 = sbr.rel (%p339) target = $region16
        $region15: #{go_embedder_forward.1} parent=11 // pred_region
          _
        $region16: #{go_embedder_forward.1} parent=11 // pred_fallthru
          _
        // Predicated region
        $region17: #{go_embedder_forward.1} parent=11 // pred_check
          %p342 = pneg %p80
        $region18: #{go_embedder_forward.1} parent=11 // pred_check_branch
          %344 = sbr.rel (%p342) target = $region20
        $region19: #{go_embedder_forward.1} parent=11 // pred_region
          _
        $region20: #{go_embedder_forward.1} parent=11 // pred_fallthru
          _
        // Predicated region
        $region21: #{go_embedder_forward.1} parent=11 // pred_check
          %p345 = pneg %p101
        $region22: #{go_embedder_forward.1} parent=11 // pred_check_branch
          %347 = sbr.rel (%p345) target = $region24
        $region23: #{go_embedder_forward.1} parent=11 // pred_region
          _
        $region24: #{go_embedder_forward.1} parent=11 // pred_fallthru
          _
        // Predicated region
        $region25: #{go_embedder_forward.1} parent=11 // pred_check
          %p348 = pneg %p152
        $region26: #{go_embedder_forward.1} parent=11 // pred_check_branch
          %350 = sbr.rel (%p348) target = $region28
        $region27: #{go_embedder_forward.1} parent=11 // pred_region
          _
        $region28: #{go_embedder_forward.1} parent=11 // pred_fallthru
          _
        // Predicated region
        $region29: #{go_embedder_forward.1} parent=11 // pred_check
          %p351 = pneg %p173
        $region30: #{go_embedder_forward.1} parent=11 // pred_check_branch
          %353 = sbr.rel (%p351) target = $region32
        $region31: #{go_embedder_forward.1} parent=11 // pred_region
          _
        $region32: #{go_embedder_forward.1} parent=11 // pred_fallthru
          _
        // Predicated region
        $region33: #{go_embedder_forward.1} parent=11 // pred_check
          %p354 = pneg %p194
        $region34: #{go_embedder_forward.1} parent=11 // pred_check_branch
          %356 = sbr.rel (%p354) target = $region36
        $region35: #{go_embedder_forward.1} parent=11 // pred_region
          _
        $region36: #{go_embedder_forward.1} parent=11 // pred_fallthru
          _
      $region12: #{go_embedder_forward.1} parent=5 // pred_fallthru
        _
      %p357 = scmp.lt.s32.totalorder %s26, 4
      // Predicated region
      $region37: #{go_embedder_forward.1} parent=5 // pred_check
        %p358 = pneg %p357
      $region38: #{go_embedder_forward.1} parent=5 // pred_check_branch
        %360 = sbr.rel (%p358) target = $region40
      $region39: #{go_embedder_forward.1} parent=5 // pred_region
        // Predicated region
        $region41: #{go_embedder_forward.1} parent=39 // pred_check
          %p361 = pneg %p125
        $region42: #{go_embedder_forward.1} parent=39 // pred_check_branch
          %363 = sbr.rel (%p361) target = $region44
        $region43: #{go_embedder_forward.1} parent=39 // pred_region
          %s364 = sand.u32 %s115, 1
          %s365 = sand.u32 %s115, 1
          %s366 = smul.addr %s365, 64
          %s367 = scalar_lea.vmem [#allocation13], %s366
          %s368 = smul.u32 %s33, 2
          %s369 = sadd.s32 %s368, %s34
          %s370 = smul.u32 4, %s369
          %s371 = smul.addr %s370, 4
          %s372 = scalar_lea.vmem %s5, %s371
          // Predicated region
          $region45: #{go_embedder_forward.1} parent=43 // pred_check
            _
          $region46: #{go_embedder_forward.1} parent=43 // pred_check_branch
            %374 = sbr.rel (0) target = $region48
          $region47: #{go_embedder_forward.1} parent=43 // pred_region
            // Predicated region
            $region49: #{go_embedder_forward.1} parent=47 // pred_check
              _
            $region50: #{go_embedder_forward.1} parent=47 // pred_check_branch
              %376 = sbr.rel (0) target = $region52
            $region51: #{go_embedder_forward.1} parent=47 // pred_region
              loop: start=0, step=1, limit=1
              $region53: #{go_embedder_forward.1} parent=51 // loop_pre_header
                _
              $region54: #{go_embedder_forward.1} parent=51 // loop_header
                %s378 = sphi 0, %s382
                %p379 = scmp.ge.s32.totalorder %s378, 1
                %s383 = sphi %s372, %s372
                %s384 = sphi %s367, %s367
              $region55: #{go_embedder_forward.1} parent=51 // loop_header_branch
                %381 = sbr.rel (%p379) target = $region59
              $region56: #{go_embedder_forward.1} parent=51 // loop_body
                %v385 = vld [vmem:[%s383] sm:$0xff]
                %386 = vst [vmem:[%s384] sm:$0xff] %v385
                %v387 = vld [vmem:[%s383 + $0x8] sm:$0xff]
                %388 = vst [vmem:[%s384 + $0x8] sm:$0xff] %v387
                %v389 = vld [vmem:[%s383 + $0x40] sm:$0xff]
                %390 = vst [vmem:[%s384 + $0x10] sm:$0xff] %v389
                %v391 = vld [vmem:[%s383 + $0x48] sm:$0xff]
                %392 = vst [vmem:[%s384 + $0x18] sm:$0xff] %v391
                %v393 = vld [vmem:[%s383 + $0x80] sm:$0xff]
                %394 = vst [vmem:[%s384 + $0x20] sm:$0xff] %v393
                %v395 = vld [vmem:[%s383 + $0x88] sm:$0xff]
                %396 = vst [vmem:[%s384 + $0x28] sm:$0xff] %v395
                %v397 = vld [vmem:[%s383 + $0xc0] sm:$0xff]
                %398 = vst [vmem:[%s384 + $0x30] sm:$0xff] %v397
                %v399 = vld [vmem:[%s383 + $0xc8] sm:$0xff]
                %400 = vst [vmem:[%s384 + $0x38] sm:$0xff] %v399
              $region57: #{go_embedder_forward.1} parent=51 // loop_footer
                %s382 = sadd.s32 1, %s378
              $region58: #{go_embedder_forward.1} parent=51 // loop_footer_branch
                %377 = sbr.rel target = $region54
              $region59: #{go_embedder_forward.1} parent=51 // loop_exit
                _
            $region52: #{go_embedder_forward.1} parent=47 // pred_fallthru
              _
            // Predicated region
            $region60: #{go_embedder_forward.1} parent=47 // pred_check
              _
            $region61: #{go_embedder_forward.1} parent=47 // pred_check_branch
              %402 = sbr.rel target = $region63
            $region62: #{go_embedder_forward.1} parent=47 // pred_region
              _
            $region63: #{go_embedder_forward.1} parent=47 // pred_fallthru
              _
          $region48: #{go_embedder_forward.1} parent=43 // pred_fallthru
            _
          %403 = vnop
        $region44: #{go_embedder_forward.1} parent=39 // pred_fallthru
          _
      $region40: #{go_embedder_forward.1} parent=5 // pred_fallthru
        _
      %p404 = scmp.le.s32.totalorder 1, %s26
      %p405 = scmp.lt.s32.totalorder %s26, 5
      %p406 = pnand %p404, %p405
      %p407 = pneg %p406
      // Predicated region
      $region64: #{go_embedder_forward.1} parent=5 // pred_check
        _
      $region65: #{go_embedder_forward.1} parent=5 // pred_check_branch
        %409 = sbr.rel (%p406) target = $region67
      $region66: #{go_embedder_forward.1} parent=5 // pred_region
        %s410 = ssub.s32 %s26, 1
        %s411 = sand.u32 %s118, 1
        %s412 = sand.u32 %s118, 1
        %s413 = smul.addr %s412, 64
        %s414 = scalar_lea.vmem [#allocation13], %s413
        // Predicated region
        $region68: #{go_embedder_forward.1} parent=66 // pred_check
          %p415 = pneg %p131
        $region69: #{go_embedder_forward.1} parent=66 // pred_check_branch
          %417 = sbr.rel (%p415) target = $region71
        $region70: #{go_embedder_forward.1} parent=66 // pred_region
          _
        $region71: #{go_embedder_forward.1} parent=66 // pred_fallthru
          _
        %p418 = pneg %p59
        %p419 = pneg %p56
        %p420 = pneg %p80
        %p421 = pneg %p77
        %p422 = pneg %p101
        %p423 = pneg %p98
        %s424 = sand.u32 %s118, 1
        %s425 = sand.u32 %s118, 1
        %s426 = smul.addr %s425, 64
        %s427 = scalar_lea.vmem [#allocation13], %s426
        %p428 = pneg %p131
        %p429 = pneg %p128
        %p430 = pneg %p152
        %p431 = pneg %p149
        %p432 = pneg %p173
        %p433 = pneg %p170
        %p434 = pneg %p194
        %p435 = pneg %p191
        %p436 = pneg %p220
        %p437 = pneg %p217
        %p438 = scmp.lt.s32.totalorder %s35, 1
        %s439 = scalar_select %p438, %s35, 1
        %s440 = smul.addr %s439, 8
        %s441 = scalar_lea.vmem %s9, %s440
        %p442 = pneg %p246
        %p443 = pneg %p243
        %p444 = scmp.lt.s32.totalorder %s35, 1
        %s445 = scalar_select %p444, %s35, 1
        %s446 = smul.addr %s445, 8
        %s447 = scalar_lea.vmem %s10, %s446
        %p448 = pneg %p272
        %p449 = pneg %p269
        %p450 = scmp.lt.s32.totalorder %s35, 1
        %s451 = scalar_select %p450, %s35, 1
        %s452 = smul.addr %s451, 8
        %s453 = scalar_lea.vmem %s11, %s452
        %p454 = pneg %p298
        %p455 = pneg %p295
        %p456 = scmp.lt.s32.totalorder %s35, 1
        %s457 = scalar_select %p456, %s35, 1
        %s458 = smul.addr %s457, 8
        %s459 = scalar_lea.vmem %s12, %s458
        %p460 = pneg %p324
        %p461 = pneg %p321
        %p462 = scmp.lt.s32.totalorder %s35, 1
        %s463 = scalar_select %p462, %s35, 1
        %s464 = smul.addr %s463, 8
        %s465 = scalar_lea.vmem %s13, %s464
        %s466 = smul.u32 %s35, 2
        %s467 = sadd.s32 %s466, %s36
        %s468 = smul.u32 4, %s467
        %p469 = scmp.lt.s32.totalorder %s35, 1
        %s470 = scalar_select %p469, %s35, 1
        %s471 = smul.addr %s470, 8
        %s472 = scalar_lea.vmem %s9, %s471
        %p473 = scmp.lt.s32.totalorder %s35, 1
        %s474 = scalar_select %p473, %s35, 1
        %s475 = smul.addr %s474, 8
        %s476 = scalar_lea.vmem %s10, %s475
        %p477 = scmp.lt.s32.totalorder %s35, 1
        %s478 = scalar_select %p477, %s35, 1
        %s479 = smul.addr %s478, 8
        %s480 = scalar_lea.vmem %s11, %s479
        %p481 = scmp.lt.s32.totalorder %s35, 1
        %s482 = scalar_select %p481, %s35, 1
        %s483 = smul.addr %s482, 8
        %s484 = scalar_lea.vmem %s12, %s483
        %p485 = scmp.lt.s32.totalorder %s35, 1
        %s486 = scalar_select %p485, %s35, 1
        %s487 = smul.addr %s486, 8
        %s488 = scalar_lea.vmem %s13, %s487
        %s490 = smul.u32 %s35, 2
        %s491 = sadd.s32 %s490, %s36
        %p492 = scmp.eq.s32.totalorder %s36, 0
        // Predicated region
        $region72: #{go_embedder_forward.1} parent=66 // pred_check
          %p493 = pneg %p492
        $region73: #{go_embedder_forward.1} parent=66 // pred_check_branch
          %495 = sbr.rel (%p493) target = $region75
        $region74: #{go_embedder_forward.1} parent=66 // pred_region
          %s496 = sld [smem:[#allocation12]]
          %s497 = smul.addr %s496, 16
          %s498 = scalar_lea.hbm %s4, %s497
          // Predicated region
          $region76: #{go_embedder_forward.1} parent=74 // pred_check
            _
          $region77: #{go_embedder_forward.1} parent=74 // pred_check_branch
            %500 = sbr.rel target = $region79
          $region78: #{go_embedder_forward.1} parent=74 // pred_region
            %501 = sst [smem:[#allocation16]] [#allocation15]
            %502 = sst [smem:[#allocation17]] [#allocation14]
          $region79: #{go_embedder_forward.1} parent=74 // pred_fallthru
            _
          %504 = shalt.err (0)
          %s506 = sshll.u32 [#allocation2], 4
          %s507 = int_to_ptr.vmem [resolvable:$true] %s506
          %509 = dma.hbm_to_vmem [thread:$0]  %s498, 16, %s507, [#allocation4]
          %s510 = sld [smem:[#allocation12 + $0x1]]
          %s511 = smul.addr %s510, 16
          %s512 = scalar_lea.hbm %s4, %s511
          %s513 = scalar_lea.vmem [#allocation2], 1
          %s514 = scalar_lea.sflag [#allocation4], 1
          // Predicated region
          $region80: #{go_embedder_forward.1} parent=74 // pred_check
            _
          $region81: #{go_embedder_forward.1} parent=74 // pred_check_branch
            %516 = sbr.rel target = $region83
          $region82: #{go_embedder_forward.1} parent=74 // pred_region
            %517 = sst [smem:[#allocation16]] [#allocation19]
            %518 = sst [smem:[#allocation17]] [#allocation18]
          $region83: #{go_embedder_forward.1} parent=74 // pred_fallthru
            _
          %520 = shalt.err (0)
          %s522 = sshll.u32 %s513, 4
          %s523 = int_to_ptr.vmem [resolvable:$true] %s522
          %525 = dma.hbm_to_vmem [thread:$0]  %s512, 16, %s523, %s514
          %s526 = sld [smem:[#allocation12 + $0x2]]
          %s527 = smul.addr %s526, 16
          %s528 = scalar_lea.hbm %s4, %s527
          %s529 = scalar_lea.vmem [#allocation2], 2
          %s530 = scalar_lea.sflag [#allocation4], 2
          // Predicated region
          $region84: #{go_embedder_forward.1} parent=74 // pred_check
            _
          $region85: #{go_embedder_forward.1} parent=74 // pred_check_branch
            %532 = sbr.rel target = $region87
          $region86: #{go_embedder_forward.1} parent=74 // pred_region
            %533 = sst [smem:[#allocation16]] [#allocation21]
            %534 = sst [smem:[#allocation17]] [#allocation20]
          $region87: #{go_embedder_forward.1} parent=74 // pred_fallthru
            _
          %536 = shalt.err (0)
          %s538 = sshll.u32 %s529, 4
          %s539 = int_to_ptr.vmem [resolvable:$true] %s538
          %541 = dma.hbm_to_vmem [thread:$0]  %s528, 16, %s539, %s530
          %s542 = sld [smem:[#allocation12 + $0x3]]
          %s543 = smul.addr %s542, 16
          %s544 = scalar_lea.hbm %s4, %s543
          %s545 = scalar_lea.vmem [#allocation2], 3
          %s546 = scalar_lea.sflag [#allocation4], 3
          // Predicated region
          $region88: #{go_embedder_forward.1} parent=74 // pred_check
            _
          $region89: #{go_embedder_forward.1} parent=74 // pred_check_branch
            %548 = sbr.rel target = $region91
          $region90: #{go_embedder_forward.1} parent=74 // pred_region
            %549 = sst [smem:[#allocation16]] [#allocation23]
            %550 = sst [smem:[#allocation17]] [#allocation22]
          $region91: #{go_embedder_forward.1} parent=74 // pred_fallthru
            _
          %552 = shalt.err (0)
          %s554 = sshll.u32 %s545, 4
          %s555 = int_to_ptr.vmem [resolvable:$true] %s554
          %557 = dma.hbm_to_vmem [thread:$0]  %s544, 16, %s555, %s546
          %s558 = sld [smem:[#allocation12 + $0x4]]
          %s559 = smul.addr %s558, 16
          %s560 = scalar_lea.hbm %s4, %s559
          %s561 = scalar_lea.vmem [#allocation2], 4
          %s562 = scalar_lea.sflag [#allocation4], 4
          // Predicated region
          $region92: #{go_embedder_forward.1} parent=74 // pred_check
            _
          $region93: #{go_embedder_forward.1} parent=74 // pred_check_branch
            %564 = sbr.rel target = $region95
          $region94: #{go_embedder_forward.1} parent=74 // pred_region
            %565 = sst [smem:[#allocation16]] [#allocation25]
            %566 = sst [smem:[#allocation17]] [#allocation24]
          $region95: #{go_embedder_forward.1} parent=74 // pred_fallthru
            _
          %568 = shalt.err (0)
          %s570 = sshll.u32 %s561, 4
          %s571 = int_to_ptr.vmem [resolvable:$true] %s570
          %573 = dma.hbm_to_vmem [thread:$0]  %s560, 16, %s571, %s562
          %s574 = sld [smem:[#allocation12 + $0x5]]
          %s575 = smul.addr %s574, 16
          %s576 = scalar_lea.hbm %s4, %s575
          %s577 = scalar_lea.vmem [#allocation2], 5
          %s578 = scalar_lea.sflag [#allocation4], 5
          // Predicated region
          $region96: #{go_embedder_forward.1} parent=74 // pred_check
            _
          $region97: #{go_embedder_forward.1} parent=74 // pred_check_branch
            %580 = sbr.rel target = $region99
          $region98: #{go_embedder_forward.1} parent=74 // pred_region
            %581 = sst [smem:[#allocation16]] [#allocation27]
            %582 = sst [smem:[#allocation17]] [#allocation26]
          $region99: #{go_embedder_forward.1} parent=74 // pred_fallthru
            _
          %584 = shalt.err (0)
          %s586 = sshll.u32 %s577, 4
          %s587 = int_to_ptr.vmem [resolvable:$true] %s586
          %589 = dma.hbm_to_vmem [thread:$0]  %s576, 16, %s587, %s578
          %s590 = sld [smem:[#allocation12 + $0x6]]
          %s591 = smul.addr %s590, 16
          %s592 = scalar_lea.hbm %s4, %s591
          %s593 = scalar_lea.vmem [#allocation2], 6
          %s594 = scalar_lea.sflag [#allocation4], 6
          // Predicated region
          $region100: #{go_embedder_forward.1} parent=74 // pred_check
            _
          $region101: #{go_embedder_forward.1} parent=74 // pred_check_branch
            %596 = sbr.rel target = $region103
          $region102: #{go_embedder_forward.1} parent=74 // pred_region
            %597 = sst [smem:[#allocation16]] [#allocation29]
            %598 = sst [smem:[#allocation17]] [#allocation28]
          $region103: #{go_embedder_forward.1} parent=74 // pred_fallthru
            _
          %600 = shalt.err (0)
          %s602 = sshll.u32 %s593, 4
          %s603 = int_to_ptr.vmem [resolvable:$true] %s602
          %605 = dma.hbm_to_vmem [thread:$0]  %s592, 16, %s603, %s594
          %s606 = sld [smem:[#allocation12 + $0x7]]
          %s607 = smul.addr %s606, 16
          %s608 = scalar_lea.hbm %s4, %s607
          %s609 = scalar_lea.vmem [#allocation2], 7
          %s610 = scalar_lea.sflag [#allocation4], 7
          // Predicated region
          $region104: #{go_embedder_forward.1} parent=74 // pred_check
            _
          $region105: #{go_embedder_forward.1} parent=74 // pred_check_branch
            %612 = sbr.rel target = $region107
          $region106: #{go_embedder_forward.1} parent=74 // pred_region
            %613 = sst [smem:[#allocation16]] [#allocation31]
            %614 = sst [smem:[#allocation17]] [#allocation30]
          $region107: #{go_embedder_forward.1} parent=74 // pred_fallthru
            _
          %616 = shalt.err (0)
          %s618 = sshll.u32 %s609, 4
          %s619 = int_to_ptr.vmem [resolvable:$true] %s618
          %621 = dma.hbm_to_vmem [thread:$0]  %s608, 16, %s619, %s610
          %s622 = sld [smem:[#allocation12]]
          %s623 = smul.u32 1, 1
          %s624 = sshll.u32 %s623, 4
          %625 = dma.done [#allocation4], %s624
          %s626 = sld [smem:[#allocation12 + $0x1]]
          %s627 = sshll.u32 %s623, 4
          %628 = dma.done %s514, %s627
          %s629 = sld [smem:[#allocation12 + $0x2]]
          %s630 = sshll.u32 %s623, 4
          %631 = dma.done %s530, %s630
          %s632 = sld [smem:[#allocation12 + $0x3]]
          %s633 = sshll.u32 %s623, 4
          %634 = dma.done %s546, %s633
          %s635 = sld [smem:[#allocation12 + $0x4]]
          %s636 = sshll.u32 %s623, 4
          %637 = dma.done %s562, %s636
          %s638 = sld [smem:[#allocation12 + $0x5]]
          %s639 = sshll.u32 %s623, 4
          %640 = dma.done %s578, %s639
          %s641 = sld [smem:[#allocation12 + $0x6]]
          %s642 = sshll.u32 %s623, 4
          %643 = dma.done %s594, %s642
          %s644 = sld [smem:[#allocation12 + $0x7]]
          %s645 = sshll.u32 %s623, 4
          %646 = dma.done %s610, %s645
          %v647 = vld [vmem:[#allocation2] sm:$0xff]
          %v648 = vmax.f32 %v647, 0.0
          %v649 = vpack.c.bf16 %v648, %v648
          %vm650 = vcmask 257024
          %651 = vst.msk [vmem:[#allocation3] sm:$0xf] %vm650, %v649
          %vm652 = vcmask 7168
          %653 = vst.msk [vmem:[#allocation5] sm:$0xff] %vm652, -1e+30
          %654 = vst.msk [vmem:[#allocation8] sm:$0xff] %vm652, -1e+30
          %655 = vst.msk [vmem:[#allocation6] sm:$0xff] %vm652, 0.0
          %656 = vst.msk [vmem:[#allocation9] sm:$0xff] %vm652, 0.0
          %657 = vst.msk [vmem:[#allocation7] sm:$0xff] %vm652, 0.0
          %658 = vst.msk [vmem:[#allocation10] sm:$0xff] %vm652, 0.0
        $region75: #{go_embedder_forward.1} parent=66 // pred_fallthru
          _
        %v659 = vld [vmem:[#allocation3] sm:$0xf]
        %v660 = vld [vmem:[%s414] sm:$0xff]
        %v661 = vld [vmem:[%s414 + $0x8] sm:$0xff]
        %v662 = vld [vmem:[%s414 + $0x10] sm:$0xff]
        %v663 = vld [vmem:[%s414 + $0x18] sm:$0xff]
        %v664 = vld [vmem:[%s414 + $0x20] sm:$0xff]
        %v665 = vld [vmem:[%s414 + $0x28] sm:$0xff]
        %v666 = vld [vmem:[%s414 + $0x30] sm:$0xff]
        %v667 = vld [vmem:[%s414 + $0x38] sm:$0xff]
        %s668 = sshra.s32 %s491, 2
        %s669 = sand.u32 %s491, 3
        %s670 = sshra.s32 %s491, 2
        %s671 = sand.u32 %s491, 3
        %s672 = smul.u32 %s668, 4
        %s673 = smul.u32 %s672, 4
        %s674 = sadd.s32 %s673, %s671
        %s675 = scalar_lea.vmem %s6, %s674
        %v676 = vld [vmem:[%s675] ss:$4 sm:$0xf]
        %v678 = vlaneseq
        %v679 = vshrl.u32 %v678, 7
        %v680 = vsub.s32 0, %v679
        %v681 = vrot.slane %v676, %v680
        %v682 = vlaneseq
        %v683 = vshrl.u32 %v682, 7
        %v684 = vsub.s32 1, %v683
        %v685 = vrot.slane %v676, %v684
        %v686 = vlaneseq
        %v687 = vshrl.u32 %v686, 7
        %v688 = vsub.s32 2, %v687
        %v689 = vrot.slane %v676, %v688
        %v690 = vlaneseq
        %v691 = vshrl.u32 %v690, 7
        %v692 = vsub.s32 3, %v691
        %v693 = vrot.slane %v676, %v692
        %v706 = vunpack.c.l.b16 %v660
        %v707 = vunpack.c.h.b16 %v660
        %v708 = vunpack.c.l.b16 %v661
        %v709 = vunpack.c.h.b16 %v661
        %v710 = vunpack.c.l.b16 %v662
        %v711 = vunpack.c.h.b16 %v662
        %v712 = vunpack.c.l.b16 %v663
        %v713 = vunpack.c.h.b16 %v663
        %v714 = vunpack.c.l.b16 %v664
        %v715 = vunpack.c.h.b16 %v664
        %v716 = vunpack.c.l.b16 %v665
        %v717 = vunpack.c.h.b16 %v665
        %v718 = vunpack.c.l.b16 %v666
        %v719 = vunpack.c.h.b16 %v666
        %v720 = vunpack.c.l.b16 %v667
        %v721 = vunpack.c.h.b16 %v667
        %v722 = vpack.c.b16 %v710, %v706
        %v723 = vpack.c.b16 %v711, %v707
        %v724 = vpack.c.b16 %v712, %v708
        %v725 = vpack.c.b16 %v713, %v709
        %v726 = vpack.c.b16 %v718, %v714
        %v727 = vpack.c.b16 %v719, %v715
        %v728 = vpack.c.b16 %v720, %v716
        %v729 = vpack.c.b16 %v721, %v717
        %vm738 = vcmask 261120
        %v740 = vsel %vm738, %v659, 0
        %742 = vmatprep.subr.bf16.mxu0 %v723
        %743 = vmatpush1.bf16.msra.mxu0 %v722
        %744 = vmatprep.subr.bf16.mxu0 %v727
        %745 = vmatpush1.bf16.msra.mxu0 %v726
        %746 = vmatprep.subr.bf16.mxu0 0
        %747 = vmatpush1.bf16.msra.mxu0 0
        %748 = vmatprep.subr.bf16.mxu0 0
        %749 = vmatpush1.bf16.msra.mxu0 0
        %750 = vmatprep.subr.bf16.mxu0 0
        %751 = vmatpush1.bf16.msra.mxu0 0
        %752 = vmatprep.subr.bf16.mxu0 0
        %753 = vmatpush1.bf16.msra.mxu0 0
        %754 = vmatprep.subr.bf16.mxu0 0
        %755 = vmatpush1.bf16.msra.mxu0 0
        %756 = vmatprep.subr.bf16.mxu0 0
        %757 = vmatpush1.bf16.msra.mxu0 0
        %758 = vmatprep.subr.bf16.mxu0 0
        %759 = vmatpush1.bf16.msra.mxu0 0
        %760 = vmatprep.subr.bf16.mxu0 0
        %761 = vmatpush1.bf16.msra.mxu0 0
        %762 = vmatprep.subr.bf16.mxu0 0
        %763 = vmatpush1.bf16.msra.mxu0 0
        %764 = vmatprep.subr.bf16.mxu0 0
        %765 = vmatpush1.bf16.msra.mxu0 0
        %766 = vmatprep.subr.bf16.mxu0 0
        %767 = vmatpush1.bf16.msra.mxu0 0
        %768 = vmatprep.subr.bf16.mxu0 0
        %769 = vmatpush1.bf16.msra.mxu0 0
        %770 = vmatprep.subr.bf16.mxu0 0
        %771 = vmatpush1.bf16.msra.mxu0 0
        %772 = vmatprep.subr.bf16.mxu0 0
        %773 = vmatpush1.bf16.msra.mxu0 0
        %774 = vmatprep.mubr.bf16.mxu0 0
        %775 = vmatmul.mubr.bf16.gmra.mrb[0].mxu0 %v740
        %v776 = vpop.f32.mrb[0].mxu0
        %v777 = vadd.f32 %v681, %v776
        %v778 = vpop.f32.mrb[0].mxu0
        %v779 = vadd.f32 %v685, %v778
        %v780 = vpop.f32.mrb[0].mxu0
        %v781 = vpop.f32.mrb[0].mxu0
        %782 = vdwg.mxu0
        %783 = vmatprep.subr.bf16.mxu0 %v725
        %784 = vmatpush1.bf16.msra.mxu0 %v724
        %785 = vmatprep.subr.bf16.mxu0 %v729
        %786 = vmatpush1.bf16.msra.mxu0 %v728
        %787 = vmatprep.subr.bf16.mxu0 0
        %788 = vmatpush1.bf16.msra.mxu0 0
        %789 = vmatprep.subr.bf16.mxu0 0
        %790 = vmatpush1.bf16.msra.mxu0 0
        %791 = vmatprep.subr.bf16.mxu0 0
        %792 = vmatpush1.bf16.msra.mxu0 0
        %793 = vmatprep.subr.bf16.mxu0 0
        %794 = vmatpush1.bf16.msra.mxu0 0
        %795 = vmatprep.subr.bf16.mxu0 0
        %796 = vmatpush1.bf16.msra.mxu0 0
        %797 = vmatprep.subr.bf16.mxu0 0
        %798 = vmatpush1.bf16.msra.mxu0 0
        %799 = vmatprep.subr.bf16.mxu0 0
        %800 = vmatpush1.bf16.msra.mxu0 0
        %801 = vmatprep.subr.bf16.mxu0 0
        %802 = vmatpush1.bf16.msra.mxu0 0
        %803 = vmatprep.subr.bf16.mxu0 0
        %804 = vmatpush1.bf16.msra.mxu0 0
        %805 = vmatprep.subr.bf16.mxu0 0
        %806 = vmatpush1.bf16.msra.mxu0 0
        %807 = vmatprep.subr.bf16.mxu0 0
        %808 = vmatpush1.bf16.msra.mxu0 0
        %809 = vmatprep.subr.bf16.mxu0 0
        %810 = vmatpush1.bf16.msra.mxu0 0
        %811 = vmatprep.subr.bf16.mxu0 0
        %812 = vmatpush1.bf16.msra.mxu0 0
        %813 = vmatprep.subr.bf16.mxu0 0
        %814 = vmatpush1.bf16.msra.mxu0 0
        %815 = vmatprep.mubr.bf16.mxu0 0
        %816 = vmatmul.mubr.bf16.gmra.mrb[0].mxu0 %v740
        %v817 = vpop.f32.mrb[0].mxu0
        %v818 = vadd.f32 %v689, %v817
        %v819 = vpop.f32.mrb[0].mxu0
        %v820 = vadd.f32 %v693, %v819
        %v821 = vpop.f32.mrb[0].mxu0
        %v822 = vpop.f32.mrb[0].mxu0
        %823 = vdwg.mxu0
        %v824 = vlaneseq
        %v825 = vand.u32 %v824, 127
        %v826 = vadd.s32 %v825, 128
        %s827 = smul.u32 %s491, 256
        %v828 = vstv %s827
        %v829 = vadd.s32 %v825, %v828
        %v830 = vadd.s32 %v826, %v828
        %v831 = vld [vmem:[#allocation5] sm:$0xff]
        %v832 = vmax.f32 %v777, %v779
        %833 = vmax.xlane.f32.xlu0 %v832
        %v834 = vpop.xlane.xlu0 %833
        %v835 = vmax.f32 %v831, %v834
        %v836 = vld [vmem:[#allocation6] sm:$0xff]
        %v837 = vsub.f32 %v831, %v835
        %v838 = vmul.f32 %v837, 1.442695
        %v839 = vpow.pop %v838
        %v840 = vmul.f32 %v836, %v839
        %842 = vset.pattern.permute.xlu0 0
        %843 = vperm.xlu0 %842, %v835
        %v844 = vpop.permute.xlu0 %843
        %v846 = vsub.f32 %v777, %v844
        %v847 = vsub.f32 %v779, %v844
        %v848 = vmul.f32 %v846, 1.442695
        %v849 = vpow.pop %v848
        %v850 = vmul.f32 %v847, 1.442695
        %v851 = vpow.pop %v850
        %v852 = vadd.f32 %v849, %v851
        %853 = vadd.xlane.f32.xlu0 %v852
        %v854 = vpop.xlane.xlu0 %853
        %v855 = vadd.f32 %v840, %v854
        %vm856 = vcmask 7168
        %857 = vst.msk [vmem:[#allocation6] sm:$0xff] %vm856, %v855
        %858 = vst.msk [vmem:[#allocation5] sm:$0xff] %vm856, %v835
        %v859 = vld [vmem:[#allocation7] sm:$0xff]
        %v860 = vld [vmem:[%s1] sm:$0xff]
        %861 = vset.pattern.permute.xlu0 0
        %862 = vperm.xlu0 %861, %v860
        %v863 = vpop.permute.xlu0 %862
        %vm864 = vcmp.eq.s32.totalorder %v829, %v863
        %vm865 = vcmp.eq.s32.totalorder %v830, %v863
        %v866 = vsel %vm864, %v777, 0.0
        %v867 = vsel %vm865, %v779, 0.0
        %v868 = vadd.f32 %v866, %v867
        %869 = vadd.xlane.f32.xlu0 %v868
        %v870 = vpop.xlane.xlu0 %869
        %v871 = vadd.f32 %v859, %v870
        %872 = vst.msk [vmem:[#allocation7] sm:$0xff] %vm856, %v871
        %v873 = vld [vmem:[#allocation8] sm:$0xff]
        %v874 = vmax.f32 %v818, %v820
        %875 = vmax.xlane.f32.xlu0 %v874
        %v876 = vpop.xlane.xlu0 %875
        %v877 = vmax.f32 %v873, %v876
        %v878 = vld [vmem:[#allocation9] sm:$0xff]
        %v879 = vsub.f32 %v873, %v877
        %v880 = vmul.f32 %v879, 1.442695
        %v881 = vpow.pop %v880
        %v882 = vmul.f32 %v878, %v881
        %884 = vset.pattern.permute.xlu0 0
        %885 = vperm.xlu0 %884, %v877
        %v886 = vpop.permute.xlu0 %885
        %v888 = vsub.f32 %v818, %v886
        %v889 = vsub.f32 %v820, %v886
        %v890 = vmul.f32 %v888, 1.442695
        %v891 = vpow.pop %v890
        %v892 = vmul.f32 %v889, 1.442695
        %v893 = vpow.pop %v892
        %v894 = vadd.f32 %v891, %v893
        %895 = vadd.xlane.f32.xlu0 %v894
        %v896 = vpop.xlane.xlu0 %895
        %v897 = vadd.f32 %v882, %v896
        %898 = vst.msk [vmem:[#allocation9] sm:$0xff] %vm856, %v897
        %899 = vst.msk [vmem:[#allocation8] sm:$0xff] %vm856, %v877
        %v900 = vld [vmem:[#allocation10] sm:$0xff]
        %v901 = vld [vmem:[%s2] sm:$0xff]
        %902 = vset.pattern.permute.xlu0 0
        %903 = vperm.xlu0 %902, %v901
        %v904 = vpop.permute.xlu0 %903
        %vm905 = vcmp.eq.s32.totalorder %v829, %v904
        %vm906 = vcmp.eq.s32.totalorder %v830, %v904
        %v907 = vsel %vm905, %v818, 0.0
        %v908 = vsel %vm906, %v820, 0.0
        %v909 = vadd.f32 %v907, %v908
        %910 = vadd.xlane.f32.xlu0 %v909
        %v911 = vpop.xlane.xlu0 %910
        %v912 = vadd.f32 %v900, %v911
        %913 = vst.msk [vmem:[#allocation10] sm:$0xff] %vm856, %v912
        %p914 = scmp.eq.s32.totalorder %s36, 1
        // Predicated region
        $region108: #{go_embedder_forward.1} parent=66 // pred_check
          %p915 = pneg %p914
        $region109: #{go_embedder_forward.1} parent=66 // pred_check_branch
          %917 = sbr.rel (%p915) target = $region111
        $region110: #{go_embedder_forward.1} parent=66 // pred_region
          %v918 = vld [vmem:[#allocation5] sm:$0xff]
          %v919 = vld [vmem:[#allocation6] sm:$0xff]
          %v920 = vlog2.pop %v919
          %v921 = vmul.f32 %v920, 0.6931472
          %v922 = vadd.f32 %v918, %v921
          %923 = vst.msk [vmem:[%s472] sm:$0xff] %vm856, %v922
          %v924 = vld [vmem:[#allocation7] sm:$0xff]
          %925 = vst.msk [vmem:[%s476] sm:$0xff] %vm856, %v924
          %v926 = vld [vmem:[#allocation8] sm:$0xff]
          %v927 = vld [vmem:[#allocation9] sm:$0xff]
          %v928 = vlog2.pop %v927
          %v929 = vmul.f32 %v928, 0.6931472
          %v930 = vadd.f32 %v926, %v929
          %931 = vst.msk [vmem:[%s480] sm:$0xff] %vm856, %v930
          %v932 = vld [vmem:[#allocation10] sm:$0xff]
          %933 = vst.msk [vmem:[%s484] sm:$0xff] %vm856, %v932
          %v934 = vld [vmem:[%s7] sm:$0xf]
          %v935 = vld [vmem:[%s7 + $0x4] sm:$0xf]
          %v936 = vld [vmem:[%s7 + $0x8] sm:$0xf]
          %v937 = vld [vmem:[%s7 + $0xc] sm:$0xf]
          %v938 = vld [vmem:[%s8] sm:$0x1]
          %v940 = vlaneseq
          %v941 = vshrl.u32 %v940, 7
          %v942 = vsub.s32 0, %v941
          %v943 = vrot.slane %v938, %v942
          %v949 = vunpack.c.l.b16 %v934
          %v950 = vunpack.c.l.b16 %v935
          %v951 = vunpack.c.l.b16 %v936
          %v952 = vunpack.c.l.b16 %v937
          %v953 = vpack.c.b16 %v950, %v949
          %v954 = vpack.c.b16 %v952, %v951
          %957 = vmatprep.subr.bf16.mxu0 0
          %958 = vmatpush1.bf16.msra.mxu0 %v953
          %959 = vmatprep.subr.bf16.mxu0 0
          %960 = vmatpush1.bf16.msra.mxu0 %v954
          %961 = vmatprep.subr.bf16.mxu0 0
          %962 = vmatpush1.bf16.msra.mxu0 0
          %963 = vmatprep.subr.bf16.mxu0 0
          %964 = vmatpush1.bf16.msra.mxu0 0
          %965 = vmatprep.subr.bf16.mxu0 0
          %966 = vmatpush1.bf16.msra.mxu0 0
          %967 = vmatprep.subr.bf16.mxu0 0
          %968 = vmatpush1.bf16.msra.mxu0 0
          %969 = vmatprep.subr.bf16.mxu0 0
          %970 = vmatpush1.bf16.msra.mxu0 0
          %971 = vmatprep.subr.bf16.mxu0 0
          %972 = vmatpush1.bf16.msra.mxu0 0
          %973 = vmatprep.subr.bf16.mxu0 0
          %974 = vmatpush1.bf16.msra.mxu0 0
          %975 = vmatprep.subr.bf16.mxu0 0
          %976 = vmatpush1.bf16.msra.mxu0 0
          %977 = vmatprep.subr.bf16.mxu0 0
          %978 = vmatpush1.bf16.msra.mxu0 0
          %979 = vmatprep.subr.bf16.mxu0 0
          %980 = vmatpush1.bf16.msra.mxu0 0
          %981 = vmatprep.subr.bf16.mxu0 0
          %982 = vmatpush1.bf16.msra.mxu0 0
          %983 = vmatprep.subr.bf16.mxu0 0
          %984 = vmatpush1.bf16.msra.mxu0 0
          %985 = vmatprep.subr.bf16.mxu0 0
          %986 = vmatpush1.bf16.msra.mxu0 0
          %987 = vmatprep.subr.bf16.mxu0 0
          %988 = vmatpush1.bf16.msra.mxu0 0
          %989 = vmatprep.mubr.bf16.mxu0 0
          %990 = vmatmul.mubr.bf16.gmra.mrb[0].mxu0 %v740
          %v991 = vpop.f32.mrb[0].mxu0
          %v992 = vadd.f32 %v943, %v991
          %v993 = vpop.f32.mrb[0].mxu0
          %v994 = vpop.f32.mrb[0].mxu0
          %v995 = vpop.f32.mrb[0].mxu0
          %996 = vdwg.mxu0
          %997 = vmax.xlane.f32.xlu0 %v992
          %v998 = vpop.xlane.xlu0 %997
          %v999 = vsub.f32 %v992, %v998
          %v1000 = vmul.f32 %v999, 1.442695
          %v1001 = vpow.pop %v1000
          %1002 = vadd.xlane.f32.xlu0 %v1001
          %v1003 = vpop.xlane.xlu0 %1002
          %v1004 = vlog2.pop %v1003
          %v1005 = vmul.f32 %v1004, 0.6931472
          %v1006 = vadd.f32 %v998, %v1005
          %v1007 = vld [vmem:[%s3] sm:$0xff]
          %1008 = vset.pattern.permute.xlu0 0
          %1009 = vperm.xlu0 %1008, %v1007
          %v1010 = vpop.permute.xlu0 %1009
          %vm1011 = vcmp.eq.s32.totalorder %v825, %v1010
          %v1012 = vsel %vm1011, %v992, 0.0
          %1013 = vadd.xlane.f32.xlu0 %v1012
          %v1014 = vpop.xlane.xlu0 %1013
          %v1015 = vsub.f32 %v1006, %v1014
          %1016 = vst.msk [vmem:[%s488] sm:$0xff] %vm856, %v1015
        $region111: #{go_embedder_forward.1} parent=66 // pred_fallthru
          _
        %p1017 = scmp.lt.s32.totalorder %s35, 1
        %s1018 = scalar_select %p1017, %s35, 1
        %s1019 = smul.addr %s1018, 8
        %s1020 = scalar_lea.vmem %s9, %s1019
        %p1021 = scmp.lt.s32.totalorder %s35, 1
        %s1022 = scalar_select %p1021, %s35, 1
        %s1023 = smul.addr %s1022, 8
        %s1024 = scalar_lea.vmem %s10, %s1023
        %p1025 = scmp.lt.s32.totalorder %s35, 1
        %s1026 = scalar_select %p1025, %s35, 1
        %s1027 = smul.addr %s1026, 8
        %s1028 = scalar_lea.vmem %s11, %s1027
        %p1029 = scmp.lt.s32.totalorder %s35, 1
        %s1030 = scalar_select %p1029, %s35, 1
        %s1031 = smul.addr %s1030, 8
        %s1032 = scalar_lea.vmem %s12, %s1031
        %p1033 = scmp.lt.s32.totalorder %s35, 1
        %s1034 = scalar_select %p1033, %s35, 1
        %s1035 = smul.addr %s1034, 8
        %s1036 = scalar_lea.vmem %s13, %s1035
        // Predicated region
        $region112: #{go_embedder_forward.1} parent=66 // pred_check
          %p1037 = pneg %p217
        $region113: #{go_embedder_forward.1} parent=66 // pred_check_branch
          %1039 = sbr.rel (%p1037) target = $region115
        $region114: #{go_embedder_forward.1} parent=66 // pred_region
          _
        $region115: #{go_embedder_forward.1} parent=66 // pred_fallthru
          _
        // Predicated region
        $region116: #{go_embedder_forward.1} parent=66 // pred_check
          %p1040 = pneg %p243
        $region117: #{go_embedder_forward.1} parent=66 // pred_check_branch
          %1042 = sbr.rel (%p1040) target = $region119
        $region118: #{go_embedder_forward.1} parent=66 // pred_region
          _
        $region119: #{go_embedder_forward.1} parent=66 // pred_fallthru
          _
        // Predicated region
        $region120: #{go_embedder_forward.1} parent=66 // pred_check
          %p1043 = pneg %p269
        $region121: #{go_embedder_forward.1} parent=66 // pred_check_branch
          %1045 = sbr.rel (%p1043) target = $region123
        $region122: #{go_embedder_forward.1} parent=66 // pred_region
          _
        $region123: #{go_embedder_forward.1} parent=66 // pred_fallthru
          _
        // Predicated region
        $region124: #{go_embedder_forward.1} parent=66 // pred_check
          %p1046 = pneg %p295
        $region125: #{go_embedder_forward.1} parent=66 // pred_check_branch
          %1048 = sbr.rel (%p1046) target = $region127
        $region126: #{go_embedder_forward.1} parent=66 // pred_region
          _
        $region127: #{go_embedder_forward.1} parent=66 // pred_fallthru
          _
        // Predicated region
        $region128: #{go_embedder_forward.1} parent=66 // pred_check
          %p1049 = pneg %p321
        $region129: #{go_embedder_forward.1} parent=66 // pred_check_branch
          %1051 = sbr.rel (%p1049) target = $region131
        $region130: #{go_embedder_forward.1} parent=66 // pred_region
          _
        $region131: #{go_embedder_forward.1} parent=66 // pred_fallthru
          _
      $region67: #{go_embedder_forward.1} parent=5 // pred_fallthru
        _
      %p1052 = scmp.le.s32.totalorder 2, %s26
      // Predicated region
      $region132: #{go_embedder_forward.1} parent=5 // pred_check
        %p1053 = pneg %p1052
      $region133: #{go_embedder_forward.1} parent=5 // pred_check_branch
        %1055 = sbr.rel (%p1053) target = $region135
      $region134: #{go_embedder_forward.1} parent=5 // pred_region
        %s1056 = ssub.s32 %s26, 2
        // Predicated region
        $region136: #{go_embedder_forward.1} parent=134 // pred_check
          %p1057 = pneg %p223
        $region137: #{go_embedder_forward.1} parent=134 // pred_check_branch
          %1059 = sbr.rel (%p1057) target = $region139
        $region138: #{go_embedder_forward.1} parent=134 // pred_region
          %p1060 = scmp.lt.s32.totalorder %s37, 1
          %s1061 = scalar_select %p1060, %s37, 1
          %s1062 = smul.addr %s1061, 8
          %s1063 = scalar_lea.vmem %s9, %s1062
        $region139: #{go_embedder_forward.1} parent=134 // pred_fallthru
          _
        // Predicated region
        $region140: #{go_embedder_forward.1} parent=134 // pred_check
          %p1064 = pneg %p249
        $region141: #{go_embedder_forward.1} parent=134 // pred_check_branch
          %1066 = sbr.rel (%p1064) target = $region143
        $region142: #{go_embedder_forward.1} parent=134 // pred_region
          %p1067 = scmp.lt.s32.totalorder %s37, 1
          %s1068 = scalar_select %p1067, %s37, 1
          %s1069 = smul.addr %s1068, 8
          %s1070 = scalar_lea.vmem %s10, %s1069
        $region143: #{go_embedder_forward.1} parent=134 // pred_fallthru
          _
        // Predicated region
        $region144: #{go_embedder_forward.1} parent=134 // pred_check
          %p1071 = pneg %p275
        $region145: #{go_embedder_forward.1} parent=134 // pred_check_branch
          %1073 = sbr.rel (%p1071) target = $region147
        $region146: #{go_embedder_forward.1} parent=134 // pred_region
          %p1074 = scmp.lt.s32.totalorder %s37, 1
          %s1075 = scalar_select %p1074, %s37, 1
          %s1076 = smul.addr %s1075, 8
          %s1077 = scalar_lea.vmem %s11, %s1076
        $region147: #{go_embedder_forward.1} parent=134 // pred_fallthru
          _
        // Predicated region
        $region148: #{go_embedder_forward.1} parent=134 // pred_check
          %p1078 = pneg %p301
        $region149: #{go_embedder_forward.1} parent=134 // pred_check_branch
          %1080 = sbr.rel (%p1078) target = $region151
        $region150: #{go_embedder_forward.1} parent=134 // pred_region
          %p1081 = scmp.lt.s32.totalorder %s37, 1
          %s1082 = scalar_select %p1081, %s37, 1
          %s1083 = smul.addr %s1082, 8
          %s1084 = scalar_lea.vmem %s12, %s1083
        $region151: #{go_embedder_forward.1} parent=134 // pred_fallthru
          _
        // Predicated region
        $region152: #{go_embedder_forward.1} parent=134 // pred_check
          %p1085 = pneg %p327
        $region153: #{go_embedder_forward.1} parent=134 // pred_check_branch
          %1087 = sbr.rel (%p1085) target = $region155
        $region154: #{go_embedder_forward.1} parent=134 // pred_region
          %p1088 = scmp.lt.s32.totalorder %s37, 1
          %s1089 = scalar_select %p1088, %s37, 1
          %s1090 = smul.addr %s1089, 8
          %s1091 = scalar_lea.vmem %s13, %s1090
        $region155: #{go_embedder_forward.1} parent=134 // pred_fallthru
          _
      $region135: #{go_embedder_forward.1} parent=5 // pred_fallthru
        _
    $region6: #{go_embedder_forward.1} parent=1 // loop_footer
      %s30 = sadd.s32 1, %s26
    $region7: #{go_embedder_forward.1} parent=1 // loop_footer_branch
      %25 = sbr.rel target = $region3
    $region8: #{go_embedder_forward.1} parent=1 // loop_exit
      _
  %1092 = vsyncmov [#allocation4]
  %s1093 = vpop.sfrf %1092
  %p1094 = scmp.eq.s32.totalorder %s1093, 0
  %p1095 = pneg %p1094
  %1097 = shalt.err (%p1095)
  %s1098 = scalar_lea.sflag [#allocation4], 1
  %1099 = vsyncmov %s1098
  %s1100 = vpop.sfrf %1099
  %p1101 = scmp.eq.s32.totalorder %s1100, 0
  %p1102 = pneg %p1101
  %1104 = shalt.err (%p1102)
  %s1105 = scalar_lea.sflag [#allocation4], 2
  %1106 = vsyncmov %s1105
  %s1107 = vpop.sfrf %1106
  %p1108 = scmp.eq.s32.totalorder %s1107, 0
  %p1109 = pneg %p1108
  %1111 = shalt.err (%p1109)
  %s1112 = scalar_lea.sflag [#allocation4], 3
  %1113 = vsyncmov %s1112
  %s1114 = vpop.sfrf %1113
  %p1115 = scmp.eq.s32.totalorder %s1114, 0
  %p1116 = pneg %p1115
  %1118 = shalt.err (%p1116)
  %s1119 = scalar_lea.sflag [#allocation4], 4
  %1120 = vsyncmov %s1119
  %s1121 = vpop.sfrf %1120
  %p1122 = scmp.eq.s32.totalorder %s1121, 0
  %p1123 = pneg %p1122
  %1125 = shalt.err (%p1123)
  %s1126 = scalar_lea.sflag [#allocation4], 5
  %1127 = vsyncmov %s1126
  %s1128 = vpop.sfrf %1127
  %p1129 = scmp.eq.s32.totalorder %s1128, 0
  %p1130 = pneg %p1129
  %1132 = shalt.err (%p1130)
  %s1133 = scalar_lea.sflag [#allocation4], 6
  %1134 = vsyncmov %s1133
  %s1135 = vpop.sfrf %1134
  %p1136 = scmp.eq.s32.totalorder %s1135, 0
  %p1137 = pneg %p1136
  %1139 = shalt.err (%p1137)
  %s1140 = scalar_lea.sflag [#allocation4], 7
  %1141 = vsyncmov %s1140
  %s1142 = vpop.sfrf %1141
  %p1143 = scmp.eq.s32.totalorder %s1142, 0
  %p1144 = pneg %p1143
  %1146 = shalt.err (%p1144)

</llo_original>
